<compile_context>
chip_gen: v5e
topology: v5e:2x2
jax: 0.10.0
libtpu: 0.0.40
codegen_flags: <defaults>
</compile_context>

<pallas_src>
import math
import functools

import jax
import jax.numpy as jnp
from jax.experimental import pallas as pl
from jax.experimental.pallas import tpu as pltpu

# ----------------------------- model config ---------------------------------
B = 2           # batch
T = 8           # decoder num_steps
TE = 12         # encoder sequence length
H = 32          # key/query/value/num_hiddens  (norm_shape = [32])
NUM_HEADS = 4
HEAD_DIM = H // NUM_HEADS
FFN_HID = 64
LN_EPS = 1e-5
SEG = 128       # lane-aligned stride between segments of the packed weight slab


# ------------------------------- kernel -------------------------------------
def _decoder_block_kernel(
    vlen_ref,                 # scalar-prefetch: enc_valid_lens (B,) int32 in SMEM
    x_ref,                    # (B*T, H)     decoder input, batch folded into rows
    enc_ref,                  # (B*TE, H)    encoder outputs, batch folded into rows
    w_ref,                    # (H, 6*SEG)   packed, 128-lane-aligned segments
    wf2_ref,                  # (F, H)       FFN second dense
    vec_ref,                  # (8, F)       rows: g1,b1,g2,b2,g3,b3,bf2(pad),bf1
    out_ref,                  # (B*T, H)
    *, num_heads, causal,
):
    nb = vlen_ref.shape[0]
    bt, h = x_ref.shape
    bte = enc_ref.shape[0]
    t = bt // nb
    te = bte // nb
    fh = wf2_ref.shape[0]
    hd = h // num_heads
    scale = 1.0 / math.sqrt(hd)

    x = x_ref[...]
    enc = enc_ref[...]
    w = w_ref[...]
    vec = vec_ref[...]

    # --- 128-lane-aligned static slices of the packed weight slab ---
    wqkv1 = w[:, 0:3 * h]                    # [0,   96)
    wo1   = w[:, SEG:SEG + h]                # [128, 160)
    wq2   = w[:, 2 * SEG:2 * SEG + h]        # [256, 288)
    wkv2  = w[:, 3 * SEG:3 * SEG + 2 * h]    # [384, 448)
    wo2   = w[:, 4 * SEG:4 * SEG + h]        # [512, 544)
    wf1   = w[:, 5 * SEG:5 * SEG + fh]       # [640, 704)

    g1, b1 = vec[0:1, :h], vec[1:2, :h]
    g2, b2 = vec[2:3, :h], vec[3:4, :h]
    g3, b3 = vec[4:5, :h], vec[5:6, :h]
    bf2 = vec[6:7, :h]
    bf1 = vec[7:8, :fh]

    def layer_norm(v, g, beta):
        mu = jnp.mean(v, axis=-1, keepdims=True)
        var = jnp.mean((v - mu) ** 2, axis=-1, keepdims=True)
        return (v - mu) * jax.lax.rsqrt(var + LN_EPS) * g + beta

    def head_block_mask(rows, cols, row_blk, col_blk):
        """(rows, cols) f32: 1.0 where row//row_blk == col//col_blk, else 0.0."""
        r = jax.lax.broadcasted_iota(jnp.int32, (rows, cols), 0)
        c = jax.lax.broadcasted_iota(jnp.int32, (rows, cols), 1)
        m = jnp.zeros((rows, cols), jnp.bool_)
        for hh in range(num_heads):                      # static unroll, VPU only
            m = m | (((r >= hh * row_blk) & (r < (hh + 1) * row_blk))
                     & ((c >= hh * col_blk) & (c < (hh + 1) * col_blk)))
        return jnp.where(m, 1.0, 0.0).astype(jnp.float32)

    def attention(q, k, vv, tq, tk, use_vlen, use_causal):
        """Head-fused, batch-block-diagonal multi-head attention.

        q: (nb*tq, h), k/vv: (nb*tk, h).  Returns (nb*tq, h) normalized context
        with heads concatenated along lanes (natural order), ready for Wo.
        One matmul for all heads' scores (vs. K^T block-diag slab) and one matmul
        for all heads' context + per-head softmax denominators.
        """
        bq, bk = nb * tq, nb * tk
        nhk = num_heads * bk

        # ---- position mask (batch block-diag / causal / valid-len), head-indep ----
        row = jax.lax.broadcasted_iota(jnp.int32, (bq, bk), 0)
        col = jax.lax.broadcasted_iota(jnp.int32, (bq, bk), 1)
        same_b = jnp.zeros((bq, bk), jnp.bool_)
        row_in, col_in = row, col
        vlen_col = jnp.zeros((bq, bk), jnp.int32) + vlen_ref[0]
        for b in range(nb):                              # static unroll; no vector div/mod
            in_rb = (row >= b * tq) & (row < (b + 1) * tq)
            in_cb = (col >= b * tk) & (col < (b + 1) * tk)
            same_b = same_b | (in_rb & in_cb)
            if b:
                row_in = jnp.where(in_rb, row - b * tq, row_in)
                col_in = jnp.where(in_cb, col - b * tk, col_in)
                if use_vlen:
                    vlen_col = jnp.where(in_cb, vlen_ref[b], vlen_col)
        masked = jnp.logical_not(same_b)
        if use_causal:                                   # dec_valid_lens = arange(1, T+1)
            masked = masked | (col_in > row_in)
        if use_vlen:                                     # d2l masked_softmax semantics
            masked = masked | (col_in >= vlen_col)
        maskf = jnp.where(masked, 1.0, 0.0).astype(jnp.float32)
        maskf = jnp.concatenate([maskf] * num_heads, axis=1)      # (bq, nh*bk)

        # ---- head-block-diagonal K^T : (h, nh*bk), single transpose per attention ----
        kt_blk = (jnp.concatenate([k.T] * num_heads, axis=1)
                  * head_block_mask(h, nhk, hd, bk))

        # ---- all heads' scores in one matmul; masked softmax (common row shift) ----
        s = jnp.dot(q * scale, kt_blk, preferred_element_type=jnp.float32)
        s = jnp.where(maskf > 0.0, -1e6, s)              # d2l masked_softmax fill value
        p = jnp.exp(s - jnp.max(s, axis=-1, keepdims=True))

        # ---- context and per-head denominators in one matmul ----
        vmask = head_block_mask(nhk, h, bk, hd)                       # (nh*bk, h)
        v_blk = jnp.concatenate([vv] * num_heads, axis=0) * vmask     # block-diag V
        cd = jnp.dot(p, jnp.concatenate([v_blk, vmask], axis=1),
                     preferred_element_type=jnp.float32)              # (bq, 2h)
        ctx, denom = cd[:, :h], cd[:, h:]
        inv = pl.reciprocal(denom, approx=True)                       # EUP
        inv = inv * (2.0 - denom * inv)                               # Newton -> f32 accuracy
        return ctx * inv

    # --- self attention (key_values == X, dec_valid_lens per `causal`) ---
    qkv1 = jnp.dot(x, wqkv1, preferred_element_type=jnp.float32)      # (bt, 3h)
    ctx1 = attention(qkv1[:, :h], qkv1[:, h:2 * h], qkv1[:, 2 * h:],
                     t, t, False, causal)
    y = layer_norm(x + jnp.dot(ctx1, wo1, preferred_element_type=jnp.float32), g1, b1)

    # --- cross attention with enc_valid_lens masking ---
    q2 = jnp.dot(y, wq2, preferred_element_type=jnp.float32)          # (bt, h)
    kv2 = jnp.dot(enc, wkv2, preferred_element_type=jnp.float32)      # (bte, 2h)
    ctx2 = attention(q2, kv2[:, :h], kv2[:, h:], t, te, True, False)
    z = layer_norm(y + jnp.dot(ctx2, wo2, preferred_element_type=jnp.float32), g2, b2)

    # --- position-wise FFN ---
    h1 = jnp.maximum(jnp.dot(z, wf1, preferred_element_type=jnp.float32) + bf1, 0.0)
    ffn = jnp.dot(h1, wf2_ref[...], preferred_element_type=jnp.float32) + bf2
    out_ref[...] = layer_norm(z + ffn, g3, b3)


# --------------------------- one-time param packing --------------------------
def pack_decoder_block_params(params):
    """Build the lane-dense, 128-aligned parameter slabs ONCE (init time, not per call)."""
    Hh = params["wq1"].shape[0]
    Fh = params["wf1"].shape[1]
    assert 3 * Hh <= SEG and 2 * Hh <= SEG and Fh <= SEG

    def seg(mats):                                    # concat + pad to a 128-lane segment
        m = jnp.concatenate(mats, axis=1)
        return jnp.pad(m, ((0, 0), (0, SEG - m.shape[1])))

    w_slab = jnp.concatenate([
        seg([params["wq1"], params["wk1"], params["wv1"]]),   # [0,   128)
        seg([params["wo1"]]),                                 # [128, 256)
        seg([params["wq2"]]),                                 # [256, 384)
        seg([params["wk2"], params["wv2"]]),                  # [384, 512)
        seg([params["wo2"]]),                                 # [512, 640)
        seg([params["wf1"]]),                                 # [640, 768)
    ], axis=1)

    pad = lambda v: jnp.pad(v, ((0, 0), (0, Fh - v.shape[1])))
    vec_slab = jnp.concatenate(
        [pad(params["g1"]), pad(params["b1"]),
         pad(params["g2"]), pad(params["b2"]),
         pad(params["g3"]), pad(params["b3"]),
         pad(params["bf2"]), params["bf1"]], axis=0)          # (8, Fh)

    return {"w_slab": w_slab, "wf2": params["wf2"], "vec_slab": vec_slab}


# ------------------------------- wrapper -------------------------------------
def decoder_block_forward(x, state, packed, *, training=False):
    """Pallas implementation of DecoderBlock.forward (eval mode: dropout = identity)."""
    enc_outputs, enc_valid_lens, cache = state
    key_values = x if cache[0] is None else jnp.concatenate([cache[0], x], axis=1)
    assert cache[0] is None, "incremental decoding cache not exercised in this demo"
    new_state = [enc_outputs, enc_valid_lens, [key_values]]

    Bb, Tt, Hh = x.shape
    Te = enc_outputs.shape[1]

    x2d = x.reshape(Bb * Tt, Hh)
    enc2d = enc_outputs.reshape(Bb * Te, Hh)
    w_slab, wf2, vec_slab = packed["w_slab"], packed["wf2"], packed["vec_slab"]

    full2d = lambda shape: pl.BlockSpec(shape, lambda i, vl: (0, 0))
    kernel = functools.partial(_decoder_block_kernel,
                               num_heads=NUM_HEADS, causal=training)

    out = pl.pallas_call(
        kernel,
        out_shape=jax.ShapeDtypeStruct((Bb * Tt, Hh), jnp.float32),
        grid_spec=pltpu.PrefetchScalarGridSpec(
            num_scalar_prefetch=1,
            grid=(1,),                                    # single step on one TC
            in_specs=[
                full2d((Bb * Tt, Hh)),                    # X       (B*T, H)
                full2d((Bb * Te, Hh)),                    # enc     (B*TE, H)
                full2d(w_slab.shape),                     # packed weights (H, 768)
                full2d(wf2.shape),                        # Wf2
                full2d(vec_slab.shape),                   # LN / bias vectors
            ],
            out_specs=full2d((Bb * Tt, Hh)),
        ),
    )(
        enc_valid_lens.astype(jnp.int32),
        x2d, enc2d, w_slab, wf2, vec_slab,
    )
    return out.reshape(Bb, Tt, Hh), new_state


# ------------------------ pure-JAX reference (checking) ----------------------
def _ref_mha(q_in, kv_in, wq, wk, wv, wo, valid_lens, causal):
    q, k, v = q_in @ wq, kv_in @ wk, kv_in @ wv
    Bb, Tq, Hh = q.shape
    Tk = kv_in.shape[1]
    hd = Hh // NUM_HEADS
    qh = q.reshape(Bb, Tq, NUM_HEADS, hd).transpose(0, 2, 1, 3)
    kh = k.reshape(Bb, Tk, NUM_HEADS, hd).transpose(0, 2, 1, 3)
    vh = v.reshape(Bb, Tk, NUM_HEADS, hd).transpose(0, 2, 1, 3)
    s = jnp.einsum("bhqd,bhkd->bhqk", qh, kh) / math.sqrt(hd)
    col = jnp.arange(Tk)
    if causal:
        row = jnp.arange(Tq)
        s = jnp.where(col[None, None, None, :] <= row[None, None, :, None], s, -1e6)
    if valid_lens is not None:
        s = jnp.where(col[None, None, None, :] < valid_lens[:, None, None, None], s, -1e6)
    p = jax.nn.softmax(s, axis=-1)
    o = jnp.einsum("bhqk,bhkd->bhqd", p, vh).transpose(0, 2, 1, 3).reshape(Bb, Tq, Hh)
    return o @ wo


def _ref_forward(x, enc, vlens, p, training=False):
    ln = lambda v, g, b: (
        (v - v.mean(-1, keepdims=True))
        * jax.lax.rsqrt(((v - v.mean(-1, keepdims=True)) ** 2).mean(-1, keepdims=True) + LN_EPS)
        * g[0] + b[0])
    x2 = _ref_mha(x, x, p["wq1"], p["wk1"], p["wv1"], p["wo1"], None, training)
    y = ln(x + x2, p["g1"], p["b1"])
    y2 = _ref_mha(y, enc, p["wq2"], p["wk2"], p["wv2"], p["wo2"], vlens, False)
    z = ln(y + y2, p["g2"], p["b2"])
    ffn = jnp.maximum(z @ p["wf1"] + p["bf1"][0], 0.0) @ p["wf2"] + p["bf2"][0]
    return ln(z + ffn, p["g3"], p["b3"])


# --------------------------------- main --------------------------------------
if __name__ == "__main__":
    key = jax.random.PRNGKey(0)
    keys = jax.random.split(key, 16)

    x = jax.random.normal(keys[0], (B, T, H), jnp.float32)
    enc_outputs = jax.random.normal(keys[1], (B, TE, H), jnp.float32)
    enc_valid_lens = jnp.array([3, 2], jnp.int32)

    def lin(k, fan_in, fan_out):
        bound = 1.0 / math.sqrt(fan_in)
        return jax.random.uniform(k, (fan_in, fan_out), jnp.float32, -bound, bound)

    params = {
        # attention1 / attention2 projections (use_bias=False in d2l MultiHeadAttention)
        "wq1": lin(keys[2], H, H), "wk1": lin(keys[3], H, H),
        "wv1": lin(keys[4], H, H), "wo1": lin(keys[5], H, H),
        "wq2": lin(keys[6], H, H), "wk2": lin(keys[7], H, H),
        "wv2": lin(keys[8], H, H), "wo2": lin(keys[9], H, H),
        # LayerNorm affine params (default init: gamma=1, beta=0)
        "g1": jnp.ones((1, H), jnp.float32), "b1": jnp.zeros((1, H), jnp.float32),
        "g2": jnp.ones((1, H), jnp.float32), "b2": jnp.zeros((1, H), jnp.float32),
        "g3": jnp.ones((1, H), jnp.float32), "b3": jnp.zeros((1, H), jnp.float32),
        # PositionWiseFFN
        "wf1": lin(keys[10], H, FFN_HID),
        "bf1": jax.random.uniform(keys[11], (1, FFN_HID), jnp.float32,
                                  -1 / math.sqrt(H), 1 / math.sqrt(H)),
        "wf2": lin(keys[12], FFN_HID, H),
        "bf2": jax.random.uniform(keys[13], (1, H), jnp.float32,
                                  -1 / math.sqrt(FFN_HID), 1 / math.sqrt(FFN_HID)),
    }

    # Pack parameters ONCE (init time), not in the per-call forward path.
    packed = jax.tree_util.tree_map(jax.block_until_ready,
                                    pack_decoder_block_params(params))

    state = [enc_outputs, enc_valid_lens, [None]]

    out, new_state = decoder_block_forward(x, state, packed, training=False)
    out = jax.block_until_ready(out)

    ref = _ref_forward(x, enc_outputs, enc_valid_lens, params, training=False)
    assert out.shape == (B, T, H)
    assert jnp.allclose(out, ref, atol=1e-4, rtol=1e-4), \
        f"max err {jnp.max(jnp.abs(out - ref))}"
    assert new_state[2][0] is x  # state[2][self.i] = key_values (== X here)

    print("KERNEL_OK")
</pallas_src>

<mosaic_0001>
module attributes {stable_mosaic.version = 11 : i64} {
  func.func @_decoder_block_kernel(%arg0: i32, %arg1: memref<2xi32, #tpu.memory_space<smem>>, %arg2: memref<16x32xf32, #tpu.memory_space<vmem>>, %arg3: memref<24x32xf32, #tpu.memory_space<vmem>>, %arg4: memref<32x768xf32, #tpu.memory_space<vmem>>, %arg5: memref<64x32xf32, #tpu.memory_space<vmem>>, %arg6: memref<8x64xf32, #tpu.memory_space<vmem>>, %arg7: memref<16x32xf32, #tpu.memory_space<vmem>>) attributes {dimension_semantics = [#tpu.dimension_semantics<arbitrary>], iteration_bounds = array<i64: 1>, scalar_prefetch = 1 : i64, scratch_operands = 0 : i64, tpu.core_type = #tpu.core_type<tc>, window_params = [{pipeline_mode = #tpu.pipeline_mode<synchronous>, transform_indices = @transform_0, window_bounds = array<i64: 16, 32>}, {pipeline_mode = #tpu.pipeline_mode<synchronous>, transform_indices = @transform_1, window_bounds = array<i64: 24, 32>}, {pipeline_mode = #tpu.pipeline_mode<synchronous>, transform_indices = @transform_2, window_bounds = array<i64: 32, 768>}, {pipeline_mode = #tpu.pipeline_mode<synchronous>, transform_indices = @transform_3, window_bounds = array<i64: 64, 32>}, {pipeline_mode = #tpu.pipeline_mode<synchronous>, transform_indices = @transform_4, window_bounds = array<i64: 8, 64>}, {pipeline_mode = #tpu.pipeline_mode<synchronous>, transform_indices = @transform_5, window_bounds = array<i64: 16, 32>}]} {
    %c0 = arith.constant 0 : index
    %c0_0 = arith.constant 0 : index
    %0 = vector.load %arg2[%c0, %c0_0] : memref<16x32xf32, #tpu.memory_space<vmem>>, vector<16x32xf32>
    %c0_1 = arith.constant 0 : index
    %c0_2 = arith.constant 0 : index
    %1 = vector.load %arg3[%c0_1, %c0_2] : memref<24x32xf32, #tpu.memory_space<vmem>>, vector<24x32xf32>
    %c0_3 = arith.constant 0 : index
    %c0_4 = arith.constant 0 : index
    %2 = vector.load %arg4[%c0_3, %c0_4] : memref<32x768xf32, #tpu.memory_space<vmem>>, vector<32x768xf32>
    %c0_5 = arith.constant 0 : index
    %c0_6 = arith.constant 0 : index
    %3 = vector.load %arg6[%c0_5, %c0_6] : memref<8x64xf32, #tpu.memory_space<vmem>>, vector<8x64xf32>
    %4 = vector.extract_strided_slice %2 {offsets = [0, 0], sizes = [32, 96], strides = [1, 1]} : vector<32x768xf32> to vector<32x96xf32>
    %5 = vector.extract_strided_slice %2 {offsets = [0, 128], sizes = [32, 32], strides = [1, 1]} : vector<32x768xf32> to vector<32x32xf32>
    %6 = vector.extract_strided_slice %2 {offsets = [0, 256], sizes = [32, 32], strides = [1, 1]} : vector<32x768xf32> to vector<32x32xf32>
    %7 = vector.extract_strided_slice %2 {offsets = [0, 384], sizes = [32, 64], strides = [1, 1]} : vector<32x768xf32> to vector<32x64xf32>
    %8 = vector.extract_strided_slice %2 {offsets = [0, 512], sizes = [32, 32], strides = [1, 1]} : vector<32x768xf32> to vector<32x32xf32>
    %9 = vector.extract_strided_slice %2 {offsets = [0, 640], sizes = [32, 64], strides = [1, 1]} : vector<32x768xf32> to vector<32x64xf32>
    %10 = vector.extract_strided_slice %3 {offsets = [0, 0], sizes = [1, 32], strides = [1, 1]} : vector<8x64xf32> to vector<1x32xf32>
    %11 = vector.extract_strided_slice %3 {offsets = [1, 0], sizes = [1, 32], strides = [1, 1]} : vector<8x64xf32> to vector<1x32xf32>
    %12 = vector.extract_strided_slice %3 {offsets = [2, 0], sizes = [1, 32], strides = [1, 1]} : vector<8x64xf32> to vector<1x32xf32>
    %13 = vector.extract_strided_slice %3 {offsets = [3, 0], sizes = [1, 32], strides = [1, 1]} : vector<8x64xf32> to vector<1x32xf32>
    %14 = vector.extract_strided_slice %3 {offsets = [4, 0], sizes = [1, 32], strides = [1, 1]} : vector<8x64xf32> to vector<1x32xf32>
    %15 = vector.extract_strided_slice %3 {offsets = [5, 0], sizes = [1, 32], strides = [1, 1]} : vector<8x64xf32> to vector<1x32xf32>
    %16 = vector.extract_strided_slice %3 {offsets = [6, 0], sizes = [1, 32], strides = [1, 1]} : vector<8x64xf32> to vector<1x32xf32>
    %17 = vector.extract_strided_slice %3 {offsets = [7, 0], sizes = [1, 64], strides = [1, 1]} : vector<8x64xf32> to vector<1x64xf32>
    %cst = arith.constant dense<0.000000e+00> : vector<16x96xf32>
    %18 = tpu.matmul %0, %4, %cst {dimension_numbers = #tpu.dot_dimension_numbers<[1], [0], [0], [1], [0, 0, 1, 1], [], []>} : vector<16x32xf32>, vector<32x96xf32>, vector<16x96xf32> -> vector<16x96xf32>
    %19 = vector.extract_strided_slice %18 {offsets = [0, 0], sizes = [16, 32], strides = [1, 1]} : vector<16x96xf32> to vector<16x32xf32>
    %20 = vector.extract_strided_slice %18 {offsets = [0, 32], sizes = [16, 32], strides = [1, 1]} : vector<16x96xf32> to vector<16x32xf32>
    %21 = vector.extract_strided_slice %18 {offsets = [0, 64], sizes = [16, 32], strides = [1, 1]} : vector<16x96xf32> to vector<16x32xf32>
    %22 = tpu.iota {dimensions = array<i32: 0>} : vector<16x16xi32>
    %23 = tpu.iota {dimensions = array<i32: 1>} : vector<16x16xi32>
    %false = arith.constant false
    %24 = vector.broadcast %false : i1 to vector<16x16xi1>
    %c0_i32 = arith.constant 0 : i32
    %25 = vector.broadcast %c0_i32 : i32 to vector<16x16xi32>
    %26 = arith.cmpi sge, %22, %25 : vector<16x16xi32>
    %c8_i32 = arith.constant 8 : i32
    %27 = vector.broadcast %c8_i32 : i32 to vector<16x16xi32>
    %28 = arith.cmpi slt, %22, %27 : vector<16x16xi32>
    %29 = arith.andi %26, %28 : vector<16x16xi1>
    %c0_i32_7 = arith.constant 0 : i32
    %30 = vector.broadcast %c0_i32_7 : i32 to vector<16x16xi32>
    %31 = arith.cmpi sge, %23, %30 : vector<16x16xi32>
    %c8_i32_8 = arith.constant 8 : i32
    %32 = vector.broadcast %c8_i32_8 : i32 to vector<16x16xi32>
    %33 = arith.cmpi slt, %23, %32 : vector<16x16xi32>
    %34 = arith.andi %31, %33 : vector<16x16xi1>
    %35 = arith.andi %29, %34 : vector<16x16xi1>
    %36 = arith.ori %24, %35 : vector<16x16xi1>
    %c8_i32_9 = arith.constant 8 : i32
    %37 = vector.broadcast %c8_i32_9 : i32 to vector<16x16xi32>
    %38 = arith.cmpi sge, %22, %37 : vector<16x16xi32>
    %c16_i32 = arith.constant 16 : i32
    %39 = vector.broadcast %c16_i32 : i32 to vector<16x16xi32>
    %40 = arith.cmpi slt, %22, %39 : vector<16x16xi32>
    %41 = arith.andi %38, %40 : vector<16x16xi1>
    %c8_i32_10 = arith.constant 8 : i32
    %42 = vector.broadcast %c8_i32_10 : i32 to vector<16x16xi32>
    %43 = arith.cmpi sge, %23, %42 : vector<16x16xi32>
    %c16_i32_11 = arith.constant 16 : i32
    %44 = vector.broadcast %c16_i32_11 : i32 to vector<16x16xi32>
    %45 = arith.cmpi slt, %23, %44 : vector<16x16xi32>
    %46 = arith.andi %43, %45 : vector<16x16xi1>
    %47 = arith.andi %41, %46 : vector<16x16xi1>
    %48 = arith.ori %36, %47 : vector<16x16xi1>
    %cst_12 = arith.constant dense<true> : vector<16x16xi1>
    %49 = arith.xori %48, %cst_12 : vector<16x16xi1>
    %cst_13 = arith.constant 1.000000e+00 : f32
    %cst_14 = arith.constant 0.000000e+00 : f32
    %50 = vector.broadcast %cst_13 : f32 to vector<16x16xf32>
    %51 = vector.broadcast %cst_14 : f32 to vector<16x16xf32>
    %52 = arith.select %49, %50, %51 : vector<16x16xi1>, vector<16x16xf32>
    %53 = tpu.concatenate %52, %52, %52, %52 in 1 : vector<16x16xf32>, vector<16x16xf32>, vector<16x16xf32>, vector<16x16xf32> -> vector<16x64xf32>
    %54 = tpu.transpose %20, [1, 0] : vector<16x32xf32> -> vector<32x16xf32>
    %55 = tpu.concatenate %54, %54, %54, %54 in 1 : vector<32x16xf32>, vector<32x16xf32>, vector<32x16xf32>, vector<32x16xf32> -> vector<32x64xf32>
    %56 = tpu.iota {dimensions = array<i32: 0>} : vector<32x64xi32>
    %57 = tpu.iota {dimensions = array<i32: 1>} : vector<32x64xi32>
    %false_15 = arith.constant false
    %58 = vector.broadcast %false_15 : i1 to vector<32x64xi1>
    %c0_i32_16 = arith.constant 0 : i32
    %59 = vector.broadcast %c0_i32_16 : i32 to vector<32x64xi32>
    %60 = arith.cmpi sge, %56, %59 : vector<32x64xi32>
    %c8_i32_17 = arith.constant 8 : i32
    %61 = vector.broadcast %c8_i32_17 : i32 to vector<32x64xi32>
    %62 = arith.cmpi slt, %56, %61 : vector<32x64xi32>
    %63 = arith.andi %60, %62 : vector<32x64xi1>
    %c0_i32_18 = arith.constant 0 : i32
    %64 = vector.broadcast %c0_i32_18 : i32 to vector<32x64xi32>
    %65 = arith.cmpi sge, %57, %64 : vector<32x64xi32>
    %c16_i32_19 = arith.constant 16 : i32
    %66 = vector.broadcast %c16_i32_19 : i32 to vector<32x64xi32>
    %67 = arith.cmpi slt, %57, %66 : vector<32x64xi32>
    %68 = arith.andi %65, %67 : vector<32x64xi1>
    %69 = arith.andi %63, %68 : vector<32x64xi1>
    %70 = arith.ori %58, %69 : vector<32x64xi1>
    %c8_i32_20 = arith.constant 8 : i32
    %71 = vector.broadcast %c8_i32_20 : i32 to vector<32x64xi32>
    %72 = arith.cmpi sge, %56, %71 : vector<32x64xi32>
    %c16_i32_21 = arith.constant 16 : i32
    %73 = vector.broadcast %c16_i32_21 : i32 to vector<32x64xi32>
    %74 = arith.cmpi slt, %56, %73 : vector<32x64xi32>
    %75 = arith.andi %72, %74 : vector<32x64xi1>
    %c16_i32_22 = arith.constant 16 : i32
    %76 = vector.broadcast %c16_i32_22 : i32 to vector<32x64xi32>
    %77 = arith.cmpi sge, %57, %76 : vector<32x64xi32>
    %c32_i32 = arith.constant 32 : i32
    %78 = vector.broadcast %c32_i32 : i32 to vector<32x64xi32>
    %79 = arith.cmpi slt, %57, %78 : vector<32x64xi32>
    %80 = arith.andi %77, %79 : vector<32x64xi1>
    %81 = arith.andi %75, %80 : vector<32x64xi1>
    %82 = arith.ori %70, %81 : vector<32x64xi1>
    %c16_i32_23 = arith.constant 16 : i32
    %83 = vector.broadcast %c16_i32_23 : i32 to vector<32x64xi32>
    %84 = arith.cmpi sge, %56, %83 : vector<32x64xi32>
    %c24_i32 = arith.constant 24 : i32
    %85 = vector.broadcast %c24_i32 : i32 to vector<32x64xi32>
    %86 = arith.cmpi slt, %56, %85 : vector<32x64xi32>
    %87 = arith.andi %84, %86 : vector<32x64xi1>
    %c32_i32_24 = arith.constant 32 : i32
    %88 = vector.broadcast %c32_i32_24 : i32 to vector<32x64xi32>
    %89 = arith.cmpi sge, %57, %88 : vector<32x64xi32>
    %c48_i32 = arith.constant 48 : i32
    %90 = vector.broadcast %c48_i32 : i32 to vector<32x64xi32>
    %91 = arith.cmpi slt, %57, %90 : vector<32x64xi32>
    %92 = arith.andi %89, %91 : vector<32x64xi1>
    %93 = arith.andi %87, %92 : vector<32x64xi1>
    %94 = arith.ori %82, %93 : vector<32x64xi1>
    %c24_i32_25 = arith.constant 24 : i32
    %95 = vector.broadcast %c24_i32_25 : i32 to vector<32x64xi32>
    %96 = arith.cmpi sge, %56, %95 : vector<32x64xi32>
    %c32_i32_26 = arith.constant 32 : i32
    %97 = vector.broadcast %c32_i32_26 : i32 to vector<32x64xi32>
    %98 = arith.cmpi slt, %56, %97 : vector<32x64xi32>
    %99 = arith.andi %96, %98 : vector<32x64xi1>
    %c48_i32_27 = arith.constant 48 : i32
    %100 = vector.broadcast %c48_i32_27 : i32 to vector<32x64xi32>
    %101 = arith.cmpi sge, %57, %100 : vector<32x64xi32>
    %c64_i32 = arith.constant 64 : i32
    %102 = vector.broadcast %c64_i32 : i32 to vector<32x64xi32>
    %103 = arith.cmpi slt, %57, %102 : vector<32x64xi32>
    %104 = arith.andi %101, %103 : vector<32x64xi1>
    %105 = arith.andi %99, %104 : vector<32x64xi1>
    %106 = arith.ori %94, %105 : vector<32x64xi1>
    %cst_28 = arith.constant 1.000000e+00 : f32
    %cst_29 = arith.constant 0.000000e+00 : f32
    %107 = vector.broadcast %cst_28 : f32 to vector<32x64xf32>
    %108 = vector.broadcast %cst_29 : f32 to vector<32x64xf32>
    %109 = arith.select %106, %107, %108 : vector<32x64xi1>, vector<32x64xf32>
    %110 = arith.mulf %55, %109 : vector<32x64xf32>
    %cst_30 = arith.constant 0.353553385 : f32
    %111 = vector.broadcast %cst_30 : f32 to vector<16x32xf32>
    %112 = arith.mulf %19, %111 : vector<16x32xf32>
    %cst_31 = arith.constant dense<0.000000e+00> : vector<16x64xf32>
    %113 = tpu.matmul %112, %110, %cst_31 {dimension_numbers = #tpu.dot_dimension_numbers<[1], [0], [0], [1], [0, 0, 1, 1], [], []>} : vector<16x32xf32>, vector<32x64xf32>, vector<16x64xf32> -> vector<16x64xf32>
    %cst_32 = arith.constant 0.000000e+00 : f32
    %114 = vector.broadcast %cst_32 : f32 to vector<16x64xf32>
    %115 = arith.cmpf ogt, %53, %114 : vector<16x64xf32>
    %cst_33 = arith.constant -1.000000e+06 : f32
    %116 = vector.broadcast %cst_33 : f32 to vector<16x64xf32>
    %117 = arith.select %115, %116, %113 : vector<16x64xi1>, vector<16x64xf32>
    %cst_34 = arith.constant dense<0xFF800000> : vector<16xf32>
    %118 = vector.multi_reduction <maximumf>, %117, %cst_34 [1] : vector<16x64xf32> to vector<16xf32>
    %119 = vector.shape_cast %118 : vector<16xf32> to vector<16x1xf32>
    %120 = vector.broadcast %119 : vector<16x1xf32> to vector<16x64xf32>
    %121 = arith.subf %117, %120 : vector<16x64xf32>
    %122 = math.exp %121 : vector<16x64xf32>
    %123 = tpu.iota {dimensions = array<i32: 0>} : vector<64x32xi32>
    %124 = tpu.iota {dimensions = array<i32: 1>} : vector<64x32xi32>
    %false_35 = arith.constant false
    %125 = vector.broadcast %false_35 : i1 to vector<64x32xi1>
    %c0_i32_36 = arith.constant 0 : i32
    %126 = vector.broadcast %c0_i32_36 : i32 to vector<64x32xi32>
    %127 = arith.cmpi sge, %123, %126 : vector<64x32xi32>
    %c16_i32_37 = arith.constant 16 : i32
    %128 = vector.broadcast %c16_i32_37 : i32 to vector<64x32xi32>
    %129 = arith.cmpi slt, %123, %128 : vector<64x32xi32>
    %130 = arith.andi %127, %129 : vector<64x32xi1>
    %c0_i32_38 = arith.constant 0 : i32
    %131 = vector.broadcast %c0_i32_38 : i32 to vector<64x32xi32>
    %132 = arith.cmpi sge, %124, %131 : vector<64x32xi32>
    %c8_i32_39 = arith.constant 8 : i32
    %133 = vector.broadcast %c8_i32_39 : i32 to vector<64x32xi32>
    %134 = arith.cmpi slt, %124, %133 : vector<64x32xi32>
    %135 = arith.andi %132, %134 : vector<64x32xi1>
    %136 = arith.andi %130, %135 : vector<64x32xi1>
    %137 = arith.ori %125, %136 : vector<64x32xi1>
    %c16_i32_40 = arith.constant 16 : i32
    %138 = vector.broadcast %c16_i32_40 : i32 to vector<64x32xi32>
    %139 = arith.cmpi sge, %123, %138 : vector<64x32xi32>
    %c32_i32_41 = arith.constant 32 : i32
    %140 = vector.broadcast %c32_i32_41 : i32 to vector<64x32xi32>
    %141 = arith.cmpi slt, %123, %140 : vector<64x32xi32>
    %142 = arith.andi %139, %141 : vector<64x32xi1>
    %c8_i32_42 = arith.constant 8 : i32
    %143 = vector.broadcast %c8_i32_42 : i32 to vector<64x32xi32>
    %144 = arith.cmpi sge, %124, %143 : vector<64x32xi32>
    %c16_i32_43 = arith.constant 16 : i32
    %145 = vector.broadcast %c16_i32_43 : i32 to vector<64x32xi32>
    %146 = arith.cmpi slt, %124, %145 : vector<64x32xi32>
    %147 = arith.andi %144, %146 : vector<64x32xi1>
    %148 = arith.andi %142, %147 : vector<64x32xi1>
    %149 = arith.ori %137, %148 : vector<64x32xi1>
    %c32_i32_44 = arith.constant 32 : i32
    %150 = vector.broadcast %c32_i32_44 : i32 to vector<64x32xi32>
    %151 = arith.cmpi sge, %123, %150 : vector<64x32xi32>
    %c48_i32_45 = arith.constant 48 : i32
    %152 = vector.broadcast %c48_i32_45 : i32 to vector<64x32xi32>
    %153 = arith.cmpi slt, %123, %152 : vector<64x32xi32>
    %154 = arith.andi %151, %153 : vector<64x32xi1>
    %c16_i32_46 = arith.constant 16 : i32
    %155 = vector.broadcast %c16_i32_46 : i32 to vector<64x32xi32>
    %156 = arith.cmpi sge, %124, %155 : vector<64x32xi32>
    %c24_i32_47 = arith.constant 24 : i32
    %157 = vector.broadcast %c24_i32_47 : i32 to vector<64x32xi32>
    %158 = arith.cmpi slt, %124, %157 : vector<64x32xi32>
    %159 = arith.andi %156, %158 : vector<64x32xi1>
    %160 = arith.andi %154, %159 : vector<64x32xi1>
    %161 = arith.ori %149, %160 : vector<64x32xi1>
    %c48_i32_48 = arith.constant 48 : i32
    %162 = vector.broadcast %c48_i32_48 : i32 to vector<64x32xi32>
    %163 = arith.cmpi sge, %123, %162 : vector<64x32xi32>
    %c64_i32_49 = arith.constant 64 : i32
    %164 = vector.broadcast %c64_i32_49 : i32 to vector<64x32xi32>
    %165 = arith.cmpi slt, %123, %164 : vector<64x32xi32>
    %166 = arith.andi %163, %165 : vector<64x32xi1>
    %c24_i32_50 = arith.constant 24 : i32
    %167 = vector.broadcast %c24_i32_50 : i32 to vector<64x32xi32>
    %168 = arith.cmpi sge, %124, %167 : vector<64x32xi32>
    %c32_i32_51 = arith.constant 32 : i32
    %169 = vector.broadcast %c32_i32_51 : i32 to vector<64x32xi32>
    %170 = arith.cmpi slt, %124, %169 : vector<64x32xi32>
    %171 = arith.andi %168, %170 : vector<64x32xi1>
    %172 = arith.andi %166, %171 : vector<64x32xi1>
    %173 = arith.ori %161, %172 : vector<64x32xi1>
    %cst_52 = arith.constant 1.000000e+00 : f32
    %cst_53 = arith.constant 0.000000e+00 : f32
    %174 = vector.broadcast %cst_52 : f32 to vector<64x32xf32>
    %175 = vector.broadcast %cst_53 : f32 to vector<64x32xf32>
    %176 = arith.select %173, %174, %175 : vector<64x32xi1>, vector<64x32xf32>
    %177 = tpu.concatenate %21, %21, %21, %21 in 0 : vector<16x32xf32>, vector<16x32xf32>, vector<16x32xf32>, vector<16x32xf32> -> vector<64x32xf32>
    %178 = arith.mulf %177, %176 : vector<64x32xf32>
    %179 = tpu.concatenate %178, %176 in 1 : vector<64x32xf32>, vector<64x32xf32> -> vector<64x64xf32>
    %cst_54 = arith.constant dense<0.000000e+00> : vector<16x64xf32>
    %180 = tpu.matmul %122, %179, %cst_54 {dimension_numbers = #tpu.dot_dimension_numbers<[1], [0], [0], [1], [0, 0, 1, 1], [], []>} : vector<16x64xf32>, vector<64x64xf32>, vector<16x64xf32> -> vector<16x64xf32>
    %181 = vector.extract_strided_slice %180 {offsets = [0, 0], sizes = [16, 32], strides = [1, 1]} : vector<16x64xf32> to vector<16x32xf32>
    %182 = vector.extract_strided_slice %180 {offsets = [0, 32], sizes = [16, 32], strides = [1, 1]} : vector<16x64xf32> to vector<16x32xf32>
    %183 = tpu.reciprocal %182 {approx = true} : vector<16x32xf32> -> vector<16x32xf32>
    %184 = arith.mulf %182, %183 : vector<16x32xf32>
    %cst_55 = arith.constant 2.000000e+00 : f32
    %185 = vector.broadcast %cst_55 : f32 to vector<16x32xf32>
    %186 = arith.subf %185, %184 : vector<16x32xf32>
    %187 = arith.mulf %183, %186 : vector<16x32xf32>
    %188 = arith.mulf %181, %187 : vector<16x32xf32>
    %cst_56 = arith.constant dense<0.000000e+00> : vector<16x32xf32>
    %189 = tpu.matmul %188, %5, %cst_56 {dimension_numbers = #tpu.dot_dimension_numbers<[1], [0], [0], [1], [0, 0, 1, 1], [], []>} : vector<16x32xf32>, vector<32x32xf32>, vector<16x32xf32> -> vector<16x32xf32>
    %190 = arith.addf %0, %189 : vector<16x32xf32>
    %cst_57 = arith.constant dense<0.000000e+00> : vector<16xf32>
    %191 = vector.multi_reduction <add>, %190, %cst_57 [1] : vector<16x32xf32> to vector<16xf32>
    %192 = vector.shape_cast %191 : vector<16xf32> to vector<16x1xf32>
    %cst_58 = arith.constant 3.200000e+01 : f32
    %193 = vector.broadcast %cst_58 : f32 to vector<16x1xf32>
    %194 = arith.divf %192, %193 : vector<16x1xf32>
    %195 = vector.broadcast %194 : vector<16x1xf32> to vector<16x32xf32>
    %196 = arith.subf %190, %195 : vector<16x32xf32>
    %197 = arith.mulf %196, %196 : vector<16x32xf32>
    %cst_59 = arith.constant dense<0.000000e+00> : vector<16xf32>
    %198 = vector.multi_reduction <add>, %197, %cst_59 [1] : vector<16x32xf32> to vector<16xf32>
    %199 = vector.shape_cast %198 : vector<16xf32> to vector<16x1xf32>
    %cst_60 = arith.constant 3.200000e+01 : f32
    %200 = vector.broadcast %cst_60 : f32 to vector<16x1xf32>
    %201 = arith.divf %199, %200 : vector<16x1xf32>
    %202 = vector.broadcast %194 : vector<16x1xf32> to vector<16x32xf32>
    %203 = arith.subf %190, %202 : vector<16x32xf32>
    %cst_61 = arith.constant 9.99999974E-6 : f32
    %204 = vector.broadcast %cst_61 : f32 to vector<16x1xf32>
    %205 = arith.addf %201, %204 : vector<16x1xf32>
    %206 = math.rsqrt %205 : vector<16x1xf32>
    %207 = vector.broadcast %206 : vector<16x1xf32> to vector<16x32xf32>
    %208 = arith.mulf %203, %207 : vector<16x32xf32>
    %209 = vector.broadcast %10 : vector<1x32xf32> to vector<16x32xf32>
    %210 = arith.mulf %208, %209 : vector<16x32xf32>
    %211 = vector.broadcast %11 : vector<1x32xf32> to vector<16x32xf32>
    %212 = arith.addf %210, %211 : vector<16x32xf32>
    %cst_62 = arith.constant dense<0.000000e+00> : vector<16x32xf32>
    %213 = tpu.matmul %212, %6, %cst_62 {dimension_numbers = #tpu.dot_dimension_numbers<[1], [0], [0], [1], [0, 0, 1, 1], [], []>} : vector<16x32xf32>, vector<32x32xf32>, vector<16x32xf32> -> vector<16x32xf32>
    %cst_63 = arith.constant dense<0.000000e+00> : vector<24x64xf32>
    %214 = tpu.matmul %1, %7, %cst_63 {dimension_numbers = #tpu.dot_dimension_numbers<[1], [0], [0], [1], [0, 0, 1, 1], [], []>} : vector<24x32xf32>, vector<32x64xf32>, vector<24x64xf32> -> vector<24x64xf32>
    %215 = vector.extract_strided_slice %214 {offsets = [0, 0], sizes = [24, 32], strides = [1, 1]} : vector<24x64xf32> to vector<24x32xf32>
    %216 = vector.extract_strided_slice %214 {offsets = [0, 32], sizes = [24, 32], strides = [1, 1]} : vector<24x64xf32> to vector<24x32xf32>
    %217 = tpu.iota {dimensions = array<i32: 0>} : vector<16x24xi32>
    %218 = tpu.iota {dimensions = array<i32: 1>} : vector<16x24xi32>
    %false_64 = arith.constant false
    %219 = vector.broadcast %false_64 : i1 to vector<16x24xi1>
    %c0_i32_65 = arith.constant 0 : i32
    %220 = vector.broadcast %c0_i32_65 : i32 to vector<16x24xi32>
    %c0_66 = arith.constant 0 : index
    %221 = memref.load %arg1[%c0_66] : memref<2xi32, #tpu.memory_space<smem>>
    %222 = vector.broadcast %221 : i32 to vector<16x24xi32>
    %223 = arith.addi %220, %222 : vector<16x24xi32>
    %c0_i32_67 = arith.constant 0 : i32
    %224 = vector.broadcast %c0_i32_67 : i32 to vector<16x24xi32>
    %225 = arith.cmpi sge, %217, %224 : vector<16x24xi32>
    %c8_i32_68 = arith.constant 8 : i32
    %226 = vector.broadcast %c8_i32_68 : i32 to vector<16x24xi32>
    %227 = arith.cmpi slt, %217, %226 : vector<16x24xi32>
    %228 = arith.andi %225, %227 : vector<16x24xi1>
    %c0_i32_69 = arith.constant 0 : i32
    %229 = vector.broadcast %c0_i32_69 : i32 to vector<16x24xi32>
    %230 = arith.cmpi sge, %218, %229 : vector<16x24xi32>
    %c12_i32 = arith.constant 12 : i32
    %231 = vector.broadcast %c12_i32 : i32 to vector<16x24xi32>
    %232 = arith.cmpi slt, %218, %231 : vector<16x24xi32>
    %233 = arith.andi %230, %232 : vector<16x24xi1>
    %234 = arith.andi %228, %233 : vector<16x24xi1>
    %235 = arith.ori %219, %234 : vector<16x24xi1>
    %c8_i32_70 = arith.constant 8 : i32
    %236 = vector.broadcast %c8_i32_70 : i32 to vector<16x24xi32>
    %237 = arith.cmpi sge, %217, %236 : vector<16x24xi32>
    %c16_i32_71 = arith.constant 16 : i32
    %238 = vector.broadcast %c16_i32_71 : i32 to vector<16x24xi32>
    %239 = arith.cmpi slt, %217, %238 : vector<16x24xi32>
    %240 = arith.andi %237, %239 : vector<16x24xi1>
    %c12_i32_72 = arith.constant 12 : i32
    %241 = vector.broadcast %c12_i32_72 : i32 to vector<16x24xi32>
    %242 = arith.cmpi sge, %218, %241 : vector<16x24xi32>
    %c24_i32_73 = arith.constant 24 : i32
    %243 = vector.broadcast %c24_i32_73 : i32 to vector<16x24xi32>
    %244 = arith.cmpi slt, %218, %243 : vector<16x24xi32>
    %245 = arith.andi %242, %244 : vector<16x24xi1>
    %246 = arith.andi %240, %245 : vector<16x24xi1>
    %247 = arith.ori %235, %246 : vector<16x24xi1>
    %c12_i32_74 = arith.constant 12 : i32
    %248 = vector.broadcast %c12_i32_74 : i32 to vector<16x24xi32>
    %249 = arith.subi %218, %248 : vector<16x24xi32>
    %250 = arith.select %245, %249, %218 : vector<16x24xi1>, vector<16x24xi32>
    %c1 = arith.constant 1 : index
    %251 = memref.load %arg1[%c1] : memref<2xi32, #tpu.memory_space<smem>>
    %252 = vector.broadcast %251 : i32 to vector<16x24xi32>
    %253 = arith.select %245, %252, %223 : vector<16x24xi1>, vector<16x24xi32>
    %cst_75 = arith.constant dense<true> : vector<16x24xi1>
    %254 = arith.xori %247, %cst_75 : vector<16x24xi1>
    %255 = arith.cmpi sge, %250, %253 : vector<16x24xi32>
    %256 = arith.ori %254, %255 : vector<16x24xi1>
    %cst_76 = arith.constant 1.000000e+00 : f32
    %cst_77 = arith.constant 0.000000e+00 : f32
    %257 = vector.broadcast %cst_76 : f32 to vector<16x24xf32>
    %258 = vector.broadcast %cst_77 : f32 to vector<16x24xf32>
    %259 = arith.select %256, %257, %258 : vector<16x24xi1>, vector<16x24xf32>
    %260 = tpu.concatenate %259, %259, %259, %259 in 1 : vector<16x24xf32>, vector<16x24xf32>, vector<16x24xf32>, vector<16x24xf32> -> vector<16x96xf32>
    %261 = tpu.transpose %215, [1, 0] : vector<24x32xf32> -> vector<32x24xf32>
    %262 = tpu.concatenate %261, %261, %261, %261 in 1 : vector<32x24xf32>, vector<32x24xf32>, vector<32x24xf32>, vector<32x24xf32> -> vector<32x96xf32>
    %263 = tpu.iota {dimensions = array<i32: 0>} : vector<32x96xi32>
    %264 = tpu.iota {dimensions = array<i32: 1>} : vector<32x96xi32>
    %false_78 = arith.constant false
    %265 = vector.broadcast %false_78 : i1 to vector<32x96xi1>
    %c0_i32_79 = arith.constant 0 : i32
    %266 = vector.broadcast %c0_i32_79 : i32 to vector<32x96xi32>
    %267 = arith.cmpi sge, %263, %266 : vector<32x96xi32>
    %c8_i32_80 = arith.constant 8 : i32
    %268 = vector.broadcast %c8_i32_80 : i32 to vector<32x96xi32>
    %269 = arith.cmpi slt, %263, %268 : vector<32x96xi32>
    %270 = arith.andi %267, %269 : vector<32x96xi1>
    %c0_i32_81 = arith.constant 0 : i32
    %271 = vector.broadcast %c0_i32_81 : i32 to vector<32x96xi32>
    %272 = arith.cmpi sge, %264, %271 : vector<32x96xi32>
    %c24_i32_82 = arith.constant 24 : i32
    %273 = vector.broadcast %c24_i32_82 : i32 to vector<32x96xi32>
    %274 = arith.cmpi slt, %264, %273 : vector<32x96xi32>
    %275 = arith.andi %272, %274 : vector<32x96xi1>
    %276 = arith.andi %270, %275 : vector<32x96xi1>
    %277 = arith.ori %265, %276 : vector<32x96xi1>
    %c8_i32_83 = arith.constant 8 : i32
    %278 = vector.broadcast %c8_i32_83 : i32 to vector<32x96xi32>
    %279 = arith.cmpi sge, %263, %278 : vector<32x96xi32>
    %c16_i32_84 = arith.constant 16 : i32
    %280 = vector.broadcast %c16_i32_84 : i32 to vector<32x96xi32>
    %281 = arith.cmpi slt, %263, %280 : vector<32x96xi32>
    %282 = arith.andi %279, %281 : vector<32x96xi1>
    %c24_i32_85 = arith.constant 24 : i32
    %283 = vector.broadcast %c24_i32_85 : i32 to vector<32x96xi32>
    %284 = arith.cmpi sge, %264, %283 : vector<32x96xi32>
    %c48_i32_86 = arith.constant 48 : i32
    %285 = vector.broadcast %c48_i32_86 : i32 to vector<32x96xi32>
    %286 = arith.cmpi slt, %264, %285 : vector<32x96xi32>
    %287 = arith.andi %284, %286 : vector<32x96xi1>
    %288 = arith.andi %282, %287 : vector<32x96xi1>
    %289 = arith.ori %277, %288 : vector<32x96xi1>
    %c16_i32_87 = arith.constant 16 : i32
    %290 = vector.broadcast %c16_i32_87 : i32 to vector<32x96xi32>
    %291 = arith.cmpi sge, %263, %290 : vector<32x96xi32>
    %c24_i32_88 = arith.constant 24 : i32
    %292 = vector.broadcast %c24_i32_88 : i32 to vector<32x96xi32>
    %293 = arith.cmpi slt, %263, %292 : vector<32x96xi32>
    %294 = arith.andi %291, %293 : vector<32x96xi1>
    %c48_i32_89 = arith.constant 48 : i32
    %295 = vector.broadcast %c48_i32_89 : i32 to vector<32x96xi32>
    %296 = arith.cmpi sge, %264, %295 : vector<32x96xi32>
    %c72_i32 = arith.constant 72 : i32
    %297 = vector.broadcast %c72_i32 : i32 to vector<32x96xi32>
    %298 = arith.cmpi slt, %264, %297 : vector<32x96xi32>
    %299 = arith.andi %296, %298 : vector<32x96xi1>
    %300 = arith.andi %294, %299 : vector<32x96xi1>
    %301 = arith.ori %289, %300 : vector<32x96xi1>
    %c24_i32_90 = arith.constant 24 : i32
    %302 = vector.broadcast %c24_i32_90 : i32 to vector<32x96xi32>
    %303 = arith.cmpi sge, %263, %302 : vector<32x96xi32>
    %c32_i32_91 = arith.constant 32 : i32
    %304 = vector.broadcast %c32_i32_91 : i32 to vector<32x96xi32>
    %305 = arith.cmpi slt, %263, %304 : vector<32x96xi32>
    %306 = arith.andi %303, %305 : vector<32x96xi1>
    %c72_i32_92 = arith.constant 72 : i32
    %307 = vector.broadcast %c72_i32_92 : i32 to vector<32x96xi32>
    %308 = arith.cmpi sge, %264, %307 : vector<32x96xi32>
    %c96_i32 = arith.constant 96 : i32
    %309 = vector.broadcast %c96_i32 : i32 to vector<32x96xi32>
    %310 = arith.cmpi slt, %264, %309 : vector<32x96xi32>
    %311 = arith.andi %308, %310 : vector<32x96xi1>
    %312 = arith.andi %306, %311 : vector<32x96xi1>
    %313 = arith.ori %301, %312 : vector<32x96xi1>
    %cst_93 = arith.constant 1.000000e+00 : f32
    %cst_94 = arith.constant 0.000000e+00 : f32
    %314 = vector.broadcast %cst_93 : f32 to vector<32x96xf32>
    %315 = vector.broadcast %cst_94 : f32 to vector<32x96xf32>
    %316 = arith.select %313, %314, %315 : vector<32x96xi1>, vector<32x96xf32>
    %317 = arith.mulf %262, %316 : vector<32x96xf32>
    %cst_95 = arith.constant 0.353553385 : f32
    %318 = vector.broadcast %cst_95 : f32 to vector<16x32xf32>
    %319 = arith.mulf %213, %318 : vector<16x32xf32>
    %cst_96 = arith.constant dense<0.000000e+00> : vector<16x96xf32>
    %320 = tpu.matmul %319, %317, %cst_96 {dimension_numbers = #tpu.dot_dimension_numbers<[1], [0], [0], [1], [0, 0, 1, 1], [], []>} : vector<16x32xf32>, vector<32x96xf32>, vector<16x96xf32> -> vector<16x96xf32>
    %cst_97 = arith.constant 0.000000e+00 : f32
    %321 = vector.broadcast %cst_97 : f32 to vector<16x96xf32>
    %322 = arith.cmpf ogt, %260, %321 : vector<16x96xf32>
    %cst_98 = arith.constant -1.000000e+06 : f32
    %323 = vector.broadcast %cst_98 : f32 to vector<16x96xf32>
    %324 = arith.select %322, %323, %320 : vector<16x96xi1>, vector<16x96xf32>
    %cst_99 = arith.constant dense<0xFF800000> : vector<16xf32>
    %325 = vector.multi_reduction <maximumf>, %324, %cst_99 [1] : vector<16x96xf32> to vector<16xf32>
    %326 = vector.shape_cast %325 : vector<16xf32> to vector<16x1xf32>
    %327 = vector.broadcast %326 : vector<16x1xf32> to vector<16x96xf32>
    %328 = arith.subf %324, %327 : vector<16x96xf32>
    %329 = math.exp %328 : vector<16x96xf32>
    %330 = tpu.iota {dimensions = array<i32: 0>} : vector<96x32xi32>
    %331 = tpu.iota {dimensions = array<i32: 1>} : vector<96x32xi32>
    %false_100 = arith.constant false
    %332 = vector.broadcast %false_100 : i1 to vector<96x32xi1>
    %c0_i32_101 = arith.constant 0 : i32
    %333 = vector.broadcast %c0_i32_101 : i32 to vector<96x32xi32>
    %334 = arith.cmpi sge, %330, %333 : vector<96x32xi32>
    %c24_i32_102 = arith.constant 24 : i32
    %335 = vector.broadcast %c24_i32_102 : i32 to vector<96x32xi32>
    %336 = arith.cmpi slt, %330, %335 : vector<96x32xi32>
    %337 = arith.andi %334, %336 : vector<96x32xi1>
    %c0_i32_103 = arith.constant 0 : i32
    %338 = vector.broadcast %c0_i32_103 : i32 to vector<96x32xi32>
    %339 = arith.cmpi sge, %331, %338 : vector<96x32xi32>
    %c8_i32_104 = arith.constant 8 : i32
    %340 = vector.broadcast %c8_i32_104 : i32 to vector<96x32xi32>
    %341 = arith.cmpi slt, %331, %340 : vector<96x32xi32>
    %342 = arith.andi %339, %341 : vector<96x32xi1>
    %343 = arith.andi %337, %342 : vector<96x32xi1>
    %344 = arith.ori %332, %343 : vector<96x32xi1>
    %c24_i32_105 = arith.constant 24 : i32
    %345 = vector.broadcast %c24_i32_105 : i32 to vector<96x32xi32>
    %346 = arith.cmpi sge, %330, %345 : vector<96x32xi32>
    %c48_i32_106 = arith.constant 48 : i32
    %347 = vector.broadcast %c48_i32_106 : i32 to vector<96x32xi32>
    %348 = arith.cmpi slt, %330, %347 : vector<96x32xi32>
    %349 = arith.andi %346, %348 : vector<96x32xi1>
    %c8_i32_107 = arith.constant 8 : i32
    %350 = vector.broadcast %c8_i32_107 : i32 to vector<96x32xi32>
    %351 = arith.cmpi sge, %331, %350 : vector<96x32xi32>
    %c16_i32_108 = arith.constant 16 : i32
    %352 = vector.broadcast %c16_i32_108 : i32 to vector<96x32xi32>
    %353 = arith.cmpi slt, %331, %352 : vector<96x32xi32>
    %354 = arith.andi %351, %353 : vector<96x32xi1>
    %355 = arith.andi %349, %354 : vector<96x32xi1>
    %356 = arith.ori %344, %355 : vector<96x32xi1>
    %c48_i32_109 = arith.constant 48 : i32
    %357 = vector.broadcast %c48_i32_109 : i32 to vector<96x32xi32>
    %358 = arith.cmpi sge, %330, %357 : vector<96x32xi32>
    %c72_i32_110 = arith.constant 72 : i32
    %359 = vector.broadcast %c72_i32_110 : i32 to vector<96x32xi32>
    %360 = arith.cmpi slt, %330, %359 : vector<96x32xi32>
    %361 = arith.andi %358, %360 : vector<96x32xi1>
    %c16_i32_111 = arith.constant 16 : i32
    %362 = vector.broadcast %c16_i32_111 : i32 to vector<96x32xi32>
    %363 = arith.cmpi sge, %331, %362 : vector<96x32xi32>
    %c24_i32_112 = arith.constant 24 : i32
    %364 = vector.broadcast %c24_i32_112 : i32 to vector<96x32xi32>
    %365 = arith.cmpi slt, %331, %364 : vector<96x32xi32>
    %366 = arith.andi %363, %365 : vector<96x32xi1>
    %367 = arith.andi %361, %366 : vector<96x32xi1>
    %368 = arith.ori %356, %367 : vector<96x32xi1>
    %c72_i32_113 = arith.constant 72 : i32
    %369 = vector.broadcast %c72_i32_113 : i32 to vector<96x32xi32>
    %370 = arith.cmpi sge, %330, %369 : vector<96x32xi32>
    %c96_i32_114 = arith.constant 96 : i32
    %371 = vector.broadcast %c96_i32_114 : i32 to vector<96x32xi32>
    %372 = arith.cmpi slt, %330, %371 : vector<96x32xi32>
    %373 = arith.andi %370, %372 : vector<96x32xi1>
    %c24_i32_115 = arith.constant 24 : i32
    %374 = vector.broadcast %c24_i32_115 : i32 to vector<96x32xi32>
    %375 = arith.cmpi sge, %331, %374 : vector<96x32xi32>
    %c32_i32_116 = arith.constant 32 : i32
    %376 = vector.broadcast %c32_i32_116 : i32 to vector<96x32xi32>
    %377 = arith.cmpi slt, %331, %376 : vector<96x32xi32>
    %378 = arith.andi %375, %377 : vector<96x32xi1>
    %379 = arith.andi %373, %378 : vector<96x32xi1>
    %380 = arith.ori %368, %379 : vector<96x32xi1>
    %cst_117 = arith.constant 1.000000e+00 : f32
    %cst_118 = arith.constant 0.000000e+00 : f32
    %381 = vector.broadcast %cst_117 : f32 to vector<96x32xf32>
    %382 = vector.broadcast %cst_118 : f32 to vector<96x32xf32>
    %383 = arith.select %380, %381, %382 : vector<96x32xi1>, vector<96x32xf32>
    %384 = tpu.concatenate %216, %216, %216, %216 in 0 : vector<24x32xf32>, vector<24x32xf32>, vector<24x32xf32>, vector<24x32xf32> -> vector<96x32xf32>
    %385 = arith.mulf %384, %383 : vector<96x32xf32>
    %386 = tpu.concatenate %385, %383 in 1 : vector<96x32xf32>, vector<96x32xf32> -> vector<96x64xf32>
    %cst_119 = arith.constant dense<0.000000e+00> : vector<16x64xf32>
    %387 = tpu.matmul %329, %386, %cst_119 {dimension_numbers = #tpu.dot_dimension_numbers<[1], [0], [0], [1], [0, 0, 1, 1], [], []>} : vector<16x96xf32>, vector<96x64xf32>, vector<16x64xf32> -> vector<16x64xf32>
    %388 = vector.extract_strided_slice %387 {offsets = [0, 0], sizes = [16, 32], strides = [1, 1]} : vector<16x64xf32> to vector<16x32xf32>
    %389 = vector.extract_strided_slice %387 {offsets = [0, 32], sizes = [16, 32], strides = [1, 1]} : vector<16x64xf32> to vector<16x32xf32>
    %390 = tpu.reciprocal %389 {approx = true} : vector<16x32xf32> -> vector<16x32xf32>
    %391 = arith.mulf %389, %390 : vector<16x32xf32>
    %cst_120 = arith.constant 2.000000e+00 : f32
    %392 = vector.broadcast %cst_120 : f32 to vector<16x32xf32>
    %393 = arith.subf %392, %391 : vector<16x32xf32>
    %394 = arith.mulf %390, %393 : vector<16x32xf32>
    %395 = arith.mulf %388, %394 : vector<16x32xf32>
    %cst_121 = arith.constant dense<0.000000e+00> : vector<16x32xf32>
    %396 = tpu.matmul %395, %8, %cst_121 {dimension_numbers = #tpu.dot_dimension_numbers<[1], [0], [0], [1], [0, 0, 1, 1], [], []>} : vector<16x32xf32>, vector<32x32xf32>, vector<16x32xf32> -> vector<16x32xf32>
    %397 = arith.addf %212, %396 : vector<16x32xf32>
    %cst_122 = arith.constant dense<0.000000e+00> : vector<16xf32>
    %398 = vector.multi_reduction <add>, %397, %cst_122 [1] : vector<16x32xf32> to vector<16xf32>
    %399 = vector.shape_cast %398 : vector<16xf32> to vector<16x1xf32>
    %cst_123 = arith.constant 3.200000e+01 : f32
    %400 = vector.broadcast %cst_123 : f32 to vector<16x1xf32>
    %401 = arith.divf %399, %400 : vector<16x1xf32>
    %402 = vector.broadcast %401 : vector<16x1xf32> to vector<16x32xf32>
    %403 = arith.subf %397, %402 : vector<16x32xf32>
    %404 = arith.mulf %403, %403 : vector<16x32xf32>
    %cst_124 = arith.constant dense<0.000000e+00> : vector<16xf32>
    %405 = vector.multi_reduction <add>, %404, %cst_124 [1] : vector<16x32xf32> to vector<16xf32>
    %406 = vector.shape_cast %405 : vector<16xf32> to vector<16x1xf32>
    %cst_125 = arith.constant 3.200000e+01 : f32
    %407 = vector.broadcast %cst_125 : f32 to vector<16x1xf32>
    %408 = arith.divf %406, %407 : vector<16x1xf32>
    %409 = vector.broadcast %401 : vector<16x1xf32> to vector<16x32xf32>
    %410 = arith.subf %397, %409 : vector<16x32xf32>
    %cst_126 = arith.constant 9.99999974E-6 : f32
    %411 = vector.broadcast %cst_126 : f32 to vector<16x1xf32>
    %412 = arith.addf %408, %411 : vector<16x1xf32>
    %413 = math.rsqrt %412 : vector<16x1xf32>
    %414 = vector.broadcast %413 : vector<16x1xf32> to vector<16x32xf32>
    %415 = arith.mulf %410, %414 : vector<16x32xf32>
    %416 = vector.broadcast %12 : vector<1x32xf32> to vector<16x32xf32>
    %417 = arith.mulf %415, %416 : vector<16x32xf32>
    %418 = vector.broadcast %13 : vector<1x32xf32> to vector<16x32xf32>
    %419 = arith.addf %417, %418 : vector<16x32xf32>
    %cst_127 = arith.constant dense<0.000000e+00> : vector<16x64xf32>
    %420 = tpu.matmul %419, %9, %cst_127 {dimension_numbers = #tpu.dot_dimension_numbers<[1], [0], [0], [1], [0, 0, 1, 1], [], []>} : vector<16x32xf32>, vector<32x64xf32>, vector<16x64xf32> -> vector<16x64xf32>
    %421 = vector.broadcast %17 : vector<1x64xf32> to vector<16x64xf32>
    %422 = arith.addf %420, %421 : vector<16x64xf32>
    %cst_128 = arith.constant 0.000000e+00 : f32
    %423 = vector.broadcast %cst_128 : f32 to vector<16x64xf32>
    %424 = arith.maximumf %422, %423 : vector<16x64xf32>
    %c0_129 = arith.constant 0 : index
    %c0_130 = arith.constant 0 : index
    %425 = vector.load %arg5[%c0_129, %c0_130] : memref<64x32xf32, #tpu.memory_space<vmem>>, vector<64x32xf32>
    %cst_131 = arith.constant dense<0.000000e+00> : vector<16x32xf32>
    %426 = tpu.matmul %424, %425, %cst_131 {dimension_numbers = #tpu.dot_dimension_numbers<[1], [0], [0], [1], [0, 0, 1, 1], [], []>} : vector<16x64xf32>, vector<64x32xf32>, vector<16x32xf32> -> vector<16x32xf32>
    %427 = vector.broadcast %16 : vector<1x32xf32> to vector<16x32xf32>
    %428 = arith.addf %426, %427 : vector<16x32xf32>
    %429 = arith.addf %419, %428 : vector<16x32xf32>
    %cst_132 = arith.constant dense<0.000000e+00> : vector<16xf32>
    %430 = vector.multi_reduction <add>, %429, %cst_132 [1] : vector<16x32xf32> to vector<16xf32>
    %431 = vector.shape_cast %430 : vector<16xf32> to vector<16x1xf32>
    %cst_133 = arith.constant 3.200000e+01 : f32
    %432 = vector.broadcast %cst_133 : f32 to vector<16x1xf32>
    %433 = arith.divf %431, %432 : vector<16x1xf32>
    %434 = vector.broadcast %433 : vector<16x1xf32> to vector<16x32xf32>
    %435 = arith.subf %429, %434 : vector<16x32xf32>
    %436 = arith.mulf %435, %435 : vector<16x32xf32>
    %cst_134 = arith.constant dense<0.000000e+00> : vector<16xf32>
    %437 = vector.multi_reduction <add>, %436, %cst_134 [1] : vector<16x32xf32> to vector<16xf32>
    %438 = vector.shape_cast %437 : vector<16xf32> to vector<16x1xf32>
    %cst_135 = arith.constant 3.200000e+01 : f32
    %439 = vector.broadcast %cst_135 : f32 to vector<16x1xf32>
    %440 = arith.divf %438, %439 : vector<16x1xf32>
    %441 = vector.broadcast %433 : vector<16x1xf32> to vector<16x32xf32>
    %442 = arith.subf %429, %441 : vector<16x32xf32>
    %cst_136 = arith.constant 9.99999974E-6 : f32
    %443 = vector.broadcast %cst_136 : f32 to vector<16x1xf32>
    %444 = arith.addf %440, %443 : vector<16x1xf32>
    %445 = math.rsqrt %444 : vector<16x1xf32>
    %446 = vector.broadcast %445 : vector<16x1xf32> to vector<16x32xf32>
    %447 = arith.mulf %442, %446 : vector<16x32xf32>
    %448 = vector.broadcast %14 : vector<1x32xf32> to vector<16x32xf32>
    %449 = arith.mulf %447, %448 : vector<16x32xf32>
    %450 = vector.broadcast %15 : vector<1x32xf32> to vector<16x32xf32>
    %451 = arith.addf %449, %450 : vector<16x32xf32>
    %c0_137 = arith.constant 0 : index
    %c0_138 = arith.constant 0 : index
    %452 = vector.load %arg7[%c0_137, %c0_138] : memref<16x32xf32, #tpu.memory_space<vmem>>, vector<16x32xf32>
    tpu.vector_store %arg7[%c0_137, %c0_138], %451 {strides = array<i32>} : memref<16x32xf32, #tpu.memory_space<vmem>>, vector<16x32xf32>,
    return
  }
  func.func @transform_0(%arg0: i32, %arg1: memref<2xi32, #tpu.memory_space<smem>>) -> (i32, i32) {
    %c0_i32 = arith.constant 0 : i32
    %c0_i32_0 = arith.constant 0 : i32
    %c0_i32_1 = arith.constant 0 : i32
    return %c0_i32, %c0_i32_0 : i32, i32
  }
  func.func @transform_1(%arg0: i32, %arg1: memref<2xi32, #tpu.memory_space<smem>>) -> (i32, i32) {
    %c0_i32 = arith.constant 0 : i32
    %c0_i32_0 = arith.constant 0 : i32
    %c0_i32_1 = arith.constant 0 : i32
    return %c0_i32, %c0_i32_0 : i32, i32
  }
  func.func @transform_2(%arg0: i32, %arg1: memref<2xi32, #tpu.memory_space<smem>>) -> (i32, i32) {
    %c0_i32 = arith.constant 0 : i32
    %c0_i32_0 = arith.constant 0 : i32
    %c0_i32_1 = arith.constant 0 : i32
    return %c0_i32, %c0_i32_0 : i32, i32
  }
  func.func @transform_3(%arg0: i32, %arg1: memref<2xi32, #tpu.memory_space<smem>>) -> (i32, i32) {
    %c0_i32 = arith.constant 0 : i32
    %c0_i32_0 = arith.constant 0 : i32
    %c0_i32_1 = arith.constant 0 : i32
    return %c0_i32, %c0_i32_0 : i32, i32
  }
  func.func @transform_4(%arg0: i32, %arg1: memref<2xi32, #tpu.memory_space<smem>>) -> (i32, i32) {
    %c0_i32 = arith.constant 0 : i32
    %c0_i32_0 = arith.constant 0 : i32
    %c0_i32_1 = arith.constant 0 : i32
    return %c0_i32, %c0_i32_0 : i32, i32
  }
  func.func @transform_5(%arg0: i32, %arg1: memref<2xi32, #tpu.memory_space<smem>>) -> (i32, i32) {
    %c0_i32 = arith.constant 0 : i32
    %c0_i32_0 = arith.constant 0 : i32
    %c0_i32_1 = arith.constant 0 : i32
    return %c0_i32, %c0_i32_0 : i32, i32
  }
}

</mosaic_0001>

<llo_original>
// kernel: tpu_custom_call.1
$region0: #{tpu_custom_call.1}
  #allocation0 [shape = 'u32[]', space=smem, size = 0x4, offset = 0x4, fixed_abs, tag = 'smem constant byte address 0x4 - core index']
  #allocation1 [shape = 'u32[72,128]{1,0:T(1,128)}', space=vmem, size = 0x9000, scoped, tag = 'internal scratch']
  #allocation2 [shape = 's32[1]{0}', space=sflag, size = 0x4, scoped, tag = 'scoped memory for tpu_custom_call.1']
  #allocation3 [shape = 'u8[512]{0}', space=smem, size = 0x200, scoped, tag = 'prefetched SMEM operand 0']
  %s0 = inlined_call_operand.vmem [shape: s32[2], index: 0, kind: input, shape index: {}]
  %s1 = inlined_call_operand.vmem [shape: f32[16,32], index: 1, kind: input, shape index: {}]
  %s2 = inlined_call_operand.vmem [shape: f32[24,32], index: 2, kind: input, shape index: {}]
  %s3 = inlined_call_operand.hbm [shape: f32[32,768], index: 3, kind: input, shape index: {}]
  %s4 = inlined_call_operand.vmem [shape: f32[64,32], index: 4, kind: input, shape index: {}]
  %s5 = inlined_call_operand.vmem [shape: f32[8,64], index: 5, kind: input, shape index: {}]
  %s6 = inlined_call_operand.hbm [shape: f32[16,32], index: 6, kind: output, shape index: {}]
  %s7 = sld [smem:[#allocation0]]
  $region34: #{tpu_custom_call.1} parent=0
    _
  %s9 = ssub.s32 1, %s7
  %s10 = scalar_select 0, %s9, %s7
  %s12 = sshll.u32 %s0, 4
  %s13 = int_to_ptr.vmem [resolvable:$true] %s12
  %15 = dma.vmem_to_smem %s13, 16, [#allocation3], [#allocation2]
  %17 = dma.done [#allocation2], 16
  %18 = sfence
  $region1: #{tpu_custom_call.1} parent=0
    #allocation4 [shape = 'u8[98304]{0}', space=vmem, size = 0x18000, scoped, tag = 'input window, operand 3, single buffered']
    #allocation5 [shape = 's32[1]{0}', space=sflag, size = 0x4, scoped, tag = 'scoped memory for tpu_custom_call.1']
    #allocation6 [shape = 's32[1]{0}', space=sflag, size = 0x4, scoped, tag = 'scoped memory for tpu_custom_call.1']
    #allocation7 [shape = 'u8[8192]{0}', space=vmem, size = 0x2000, scoped, tag = 'output window, operand 0, single buffered']
    %19 = vsyncpa [#allocation5], 0
    %20 = vsyncpa [#allocation6], 0
    // Predicated region
    $region2: #{tpu_custom_call.1} parent=1 // pred_check
      _
    $region3: #{tpu_custom_call.1} parent=1 // pred_check_branch
      %22 = sbr.rel (0) target = $region5
    $region4: #{tpu_custom_call.1} parent=1 // pred_region
      _
    $region5: #{tpu_custom_call.1} parent=1 // pred_fallthru
      _
    // Predicated region
    $region6: #{tpu_custom_call.1} parent=1 // pred_check
      _
    $region7: #{tpu_custom_call.1} parent=1 // pred_check_branch
      %24 = sbr.rel (0) target = $region9
    $region8: #{tpu_custom_call.1} parent=1 // pred_region
      _
    $region9: #{tpu_custom_call.1} parent=1 // pred_fallthru
      _
    // Predicated region
    $region10: #{tpu_custom_call.1} parent=1 // pred_check
      _
    $region11: #{tpu_custom_call.1} parent=1 // pred_check_branch
      %26 = sbr.rel (0) target = $region13
    $region12: #{tpu_custom_call.1} parent=1 // pred_region
      %28 = vsyncadd [#allocation5], 0
      %s29 = sshll.u32 %s3, 4
      %s30 = int_to_ptr.hbm [resolvable:$true] %s29
      %s31 = sshll.u32 [#allocation4], 4
      %s32 = int_to_ptr.vmem [resolvable:$true] %s31
      %37 = dma.hbm_to_vmem [thread:$0]  %s30, 3072, %s32, [#allocation5], 768, 768, 48
    $region13: #{tpu_custom_call.1} parent=1 // pred_fallthru
      _
    // Predicated region
    $region14: #{tpu_custom_call.1} parent=1 // pred_check
      _
    $region15: #{tpu_custom_call.1} parent=1 // pred_check_branch
      %39 = sbr.rel (0) target = $region17
    $region16: #{tpu_custom_call.1} parent=1 // pred_region
      _
    $region17: #{tpu_custom_call.1} parent=1 // pred_fallthru
      _
    // Predicated region
    $region18: #{tpu_custom_call.1} parent=1 // pred_check
      _
    $region19: #{tpu_custom_call.1} parent=1 // pred_check_branch
      %41 = sbr.rel (0) target = $region21
    $region20: #{tpu_custom_call.1} parent=1 // pred_region
      _
    $region21: #{tpu_custom_call.1} parent=1 // pred_fallthru
      _
    // Predicated region
    $region22: #{tpu_custom_call.1} parent=1 // pred_check
      _
    $region23: #{tpu_custom_call.1} parent=1 // pred_check_branch
      %43 = sbr.rel (0) target = $region25
    $region24: #{tpu_custom_call.1} parent=1 // pred_region
      %45 = dma.done [#allocation5], 3072
    $region25: #{tpu_custom_call.1} parent=1 // pred_fallthru
      _
    %v46 = vld [vmem:[%s1] sm:$0xff]
    %v47 = vld [vmem:[%s1 + $0x8] sm:$0xff]
    %v48 = vld [vmem:[%s2] sm:$0xff]
    %v49 = vld [vmem:[%s2 + $0x8] sm:$0xff]
    %v50 = vld [vmem:[%s2 + $0x10] sm:$0xff]
    %v51 = vld [vmem:[#allocation4] sm:$0xff]
    %v52 = vld [vmem:[#allocation4 + $0x8] sm:$0xff]
    %v53 = vld [vmem:[#allocation4 + $0x10] sm:$0xff]
    %v54 = vld [vmem:[#allocation4 + $0x18] sm:$0xff]
    %v55 = vld [vmem:[#allocation4 + $0x20] sm:$0xff]
    %v56 = vld [vmem:[#allocation4 + $0x28] sm:$0xff]
    %v57 = vld [vmem:[#allocation4 + $0x30] sm:$0xff]
    %v58 = vld [vmem:[#allocation4 + $0x38] sm:$0xff]
    %v59 = vld [vmem:[#allocation4 + $0x40] sm:$0xff]
    %v60 = vld [vmem:[#allocation4 + $0x48] sm:$0xff]
    %v61 = vld [vmem:[#allocation4 + $0x50] sm:$0xff]
    %v62 = vld [vmem:[#allocation4 + $0x58] sm:$0xff]
    %v63 = vld [vmem:[#allocation4 + $0x60] sm:$0xff]
    %v64 = vld [vmem:[#allocation4 + $0x68] sm:$0xff]
    %v65 = vld [vmem:[#allocation4 + $0x70] sm:$0xff]
    %v66 = vld [vmem:[#allocation4 + $0x78] sm:$0xff]
    %v67 = vld [vmem:[#allocation4 + $0x80] sm:$0xff]
    %v68 = vld [vmem:[#allocation4 + $0x88] sm:$0xff]
    %v69 = vld [vmem:[#allocation4 + $0x90] sm:$0xff]
    %v70 = vld [vmem:[#allocation4 + $0x98] sm:$0xff]
    %v71 = vld [vmem:[#allocation4 + $0xa0] sm:$0xff]
    %v72 = vld [vmem:[#allocation4 + $0xa8] sm:$0xff]
    %v73 = vld [vmem:[#allocation4 + $0xb0] sm:$0xff]
    %v74 = vld [vmem:[#allocation4 + $0xb8] sm:$0xff]
    %v75 = vld [vmem:[%s5] sm:$0xff]
    %vm76 = vcmask 261120
    %v78 = vsel %vm76, %v46, 0
    %v81 = vsel %vm76, %v47, 0
    %83 = vmatpush.msra.mxu0 0.0
    %84 = vmatpush.msra.mxu0 0.0
    %85 = vmatpush.msra.mxu0 0.0
    %86 = vmatpush.msra.mxu0 0.0
    %87 = vmatpush.msra.mxu0 0.0
    %88 = vmatpush.msra.mxu0 0.0
    %89 = vmatpush.msra.mxu0 0.0
    %90 = vmatpush.msra.mxu0 0.0
    %91 = vmatpush.msra.mxu0 0.0
    %92 = vmatpush.msra.mxu0 0.0
    %93 = vmatpush.msra.mxu0 0.0
    %94 = vmatpush.msra.mxu0 0.0
    %95 = vmatpush.msra.mxu0 %v69
    %96 = vmatpush.msra.mxu0 %v63
    %97 = vmatpush.msra.mxu0 %v57
    %98 = vmatpush.msra.mxu0 %v51
    %99 = vmatmul.f32.gmra.mxu0 %v78
    %v100 = vpop.f32.mrf.mxu0
    %v101 = vadd.f32 0.0, %v100
    %102 = vmatmul.f32.gmra.mxu0 %v81
    %v103 = vpop.f32.mrf.mxu0
    %v104 = vadd.f32 0.0, %v103
    %105 = vdwg.mxu0
    %v106 = vlaneseq
    %v107 = vshrl.u32 %v106, 7
    %v108 = vadd.s32 %v107, 8
    %v109 = vlaneseq
    %v110 = vand.u32 %v109, 127
    %vm111 = vcmp.ge.s32.totalorder %v107, 0
    %vm112 = vcmp.ge.s32.totalorder %v108, 0
    %vm113 = vcmp.lt.s32.totalorder %v107, 8
    %vm114 = vcmp.lt.s32.totalorder %v108, 8
    %vm115 = vmand %vm111, %vm113
    %vm116 = vmand %vm112, %vm114
    %vm117 = vcmp.ge.s32.totalorder %v110, 0
    %vm118 = vcmp.lt.s32.totalorder %v110, 8
    %vm119 = vmand %vm117, %vm118
    %vm120 = vmand %vm115, %vm119
    %vm121 = vmand %vm116, %vm119
    %vm122 = vcmp.ge.s32.totalorder %v107, 8
    %vm123 = vcmp.ge.s32.totalorder %v108, 8
    %vm124 = vcmp.lt.s32.totalorder %v107, 16
    %vm125 = vcmp.lt.s32.totalorder %v108, 16
    %vm126 = vmand %vm122, %vm124
    %vm127 = vmand %vm123, %vm125
    %vm128 = vcmp.ge.s32.totalorder %v110, 8
    %vm129 = vcmp.lt.s32.totalorder %v110, 16
    %vm130 = vmand %vm128, %vm129
    %vm131 = vmand %vm126, %vm130
    %vm132 = vmand %vm127, %vm130
    %vm133 = vmor %vm120, %vm131
    %vm134 = vmor %vm121, %vm132
    %vm135 = vmxor %vm133, 1
    %vm136 = vmxor %vm134, 1
    %v137 = vsel %vm135, 1.0, 0.0
    %v138 = vsel %vm136, 1.0, 0.0
    %141 = vrot.lane.b32.xlu0 %v137, 16
    %v142 = vpop.permute.xlu0 %141
    %143 = vrot.lane.b32.xlu0 %v138, 16
    %v144 = vpop.permute.xlu0 %143
    %147 = vrot.lane.b32.xlu0 %v137, 32
    %v148 = vpop.permute.xlu0 %147
    %149 = vrot.lane.b32.xlu0 %v138, 32
    %v150 = vpop.permute.xlu0 %149
    %153 = vrot.lane.b32.xlu0 %v137, 48
    %v154 = vpop.permute.xlu0 %153
    %155 = vrot.lane.b32.xlu0 %v138, 48
    %v156 = vpop.permute.xlu0 %155
    %vm159 = vcmask 130048
    %v160 = vsel %vm159, %v137, %v142
    %v161 = vsel %vm159, %v138, %v144
    %v162 = vsel %vm76, %v160, %v148
    %v163 = vsel %vm76, %v161, %v150
    %vm164 = vcmask 392192
    %v165 = vsel %vm164, %v162, %v154
    %v166 = vsel %vm164, %v163, %v156
    %169 = vrot.lane.b32.xlu0 %v101, 96
    %v170 = vpop.permute.xlu0 %169
    %171 = vrot.lane.b32.xlu0 %v104, 96
    %v172 = vpop.permute.xlu0 %171
    %175 = vxpose.xlu0.b32.start [1/16] %v170, 128
    %176 = vxpose.xlu0.b32.cont [2/16] %v172, 128
    %177 = vxpose.xlu0.b32.cont [3/16] 0.0, 128
    %178 = vxpose.xlu0.b32.cont [4/16] 0.0, 128
    %179 = vxpose.xlu0.b32.cont [5/16] 0.0, 128
    %180 = vxpose.xlu0.b32.cont [6/16] 0.0, 128
    %181 = vxpose.xlu0.b32.cont [7/16] 0.0, 128
    %182 = vxpose.xlu0.b32.cont [8/16] 0.0, 128
    %183 = vxpose.xlu0.b32.cont [9/16] 0.0, 128
    %184 = vxpose.xlu0.b32.cont [10/16] 0.0, 128
    %185 = vxpose.xlu0.b32.cont [11/16] 0.0, 128
    %186 = vxpose.xlu0.b32.cont [12/16] 0.0, 128
    %187 = vxpose.xlu0.b32.cont [13/16] 0.0, 128
    %188 = vxpose.xlu0.b32.cont [14/16] 0.0, 128
    %189 = vxpose.xlu0.b32.cont [15/16] 0.0, 128
    %190 = vxpose.xlu0.b32.end [16/16] 0.0, 128
    %v191 = vpop.trf.xlu0
    %v192 = vpop.trf.xlu0
    %v193 = vpop.trf.xlu0
    %v194 = vpop.trf.xlu0
    %v195 = vpop.trf.xlu0
    %v196 = vpop.trf.xlu0
    %v197 = vpop.trf.xlu0
    %v198 = vpop.trf.xlu0
    %v199 = vpop.trf.xlu0
    %v200 = vpop.trf.xlu0
    %v201 = vpop.trf.xlu0
    %v202 = vpop.trf.xlu0
    %v203 = vpop.trf.xlu0
    %v204 = vpop.trf.xlu0
    %v205 = vpop.trf.xlu0
    %v206 = vpop.trf.xlu0
    %211 = vrot.lane.b32.xlu0 %v191, 16
    %v212 = vpop.permute.xlu0 %211
    %213 = vrot.lane.b32.xlu0 %v192, 16
    %v214 = vpop.permute.xlu0 %213
    %215 = vrot.lane.b32.xlu0 %v193, 16
    %v216 = vpop.permute.xlu0 %215
    %217 = vrot.lane.b32.xlu0 %v194, 16
    %v218 = vpop.permute.xlu0 %217
    %223 = vrot.lane.b32.xlu0 %v191, 32
    %v224 = vpop.permute.xlu0 %223
    %225 = vrot.lane.b32.xlu0 %v192, 32
    %v226 = vpop.permute.xlu0 %225
    %227 = vrot.lane.b32.xlu0 %v193, 32
    %v228 = vpop.permute.xlu0 %227
    %229 = vrot.lane.b32.xlu0 %v194, 32
    %v230 = vpop.permute.xlu0 %229
    %235 = vrot.lane.b32.xlu0 %v191, 48
    %v236 = vpop.permute.xlu0 %235
    %237 = vrot.lane.b32.xlu0 %v192, 48
    %v238 = vpop.permute.xlu0 %237
    %239 = vrot.lane.b32.xlu0 %v193, 48
    %v240 = vpop.permute.xlu0 %239
    %241 = vrot.lane.b32.xlu0 %v194, 48
    %v242 = vpop.permute.xlu0 %241
    %v247 = vsel %vm159, %v191, %v212
    %v248 = vsel %vm159, %v192, %v214
    %v249 = vsel %vm159, %v193, %v216
    %v250 = vsel %vm159, %v194, %v218
    %v251 = vsel %vm76, %v247, %v224
    %v252 = vsel %vm76, %v248, %v226
    %v253 = vsel %vm76, %v249, %v228
    %v254 = vsel %vm76, %v250, %v230
    %v255 = vsel %vm164, %v251, %v236
    %v256 = vsel %vm164, %v252, %v238
    %v257 = vsel %vm164, %v253, %v240
    %v258 = vsel %vm164, %v254, %v242
    %v259 = vadd.s32 %v107, 16
    %v260 = vadd.s32 %v107, 24
    %vm261 = vcmp.ge.s32.totalorder %v259, 0
    %vm262 = vcmp.ge.s32.totalorder %v260, 0
    %vm263 = vcmp.lt.s32.totalorder %v259, 8
    %vm264 = vcmp.lt.s32.totalorder %v260, 8
    %vm265 = vmand %vm261, %vm263
    %vm266 = vmand %vm262, %vm264
    %vm267 = vmand %vm117, %vm129
    %vm268 = vmand %vm115, %vm267
    %vm269 = vmand %vm116, %vm267
    %vm270 = vmand %vm265, %vm267
    %vm271 = vmand %vm266, %vm267
    %vm272 = vcmp.ge.s32.totalorder %v259, 8
    %vm273 = vcmp.ge.s32.totalorder %v260, 8
    %vm274 = vcmp.lt.s32.totalorder %v259, 16
    %vm275 = vcmp.lt.s32.totalorder %v260, 16
    %vm276 = vmand %vm272, %vm274
    %vm277 = vmand %vm273, %vm275
    %vm278 = vcmp.ge.s32.totalorder %v110, 16
    %vm279 = vcmp.lt.s32.totalorder %v110, 32
    %vm280 = vmand %vm278, %vm279
    %vm281 = vmand %vm126, %vm280
    %vm282 = vmand %vm127, %vm280
    %vm283 = vmand %vm276, %vm280
    %vm284 = vmand %vm277, %vm280
    %vm285 = vmor %vm268, %vm281
    %vm286 = vmor %vm269, %vm282
    %vm287 = vmor %vm270, %vm283
    %vm288 = vmor %vm271, %vm284
    %vm289 = vcmp.ge.s32.totalorder %v107, 16
    %vm290 = vcmp.ge.s32.totalorder %v108, 16
    %vm291 = vcmp.ge.s32.totalorder %v259, 16
    %vm292 = vcmp.ge.s32.totalorder %v260, 16
    %vm293 = vcmp.lt.s32.totalorder %v107, 24
    %vm294 = vcmp.lt.s32.totalorder %v108, 24
    %vm295 = vcmp.lt.s32.totalorder %v259, 24
    %vm296 = vcmp.lt.s32.totalorder %v260, 24
    %vm297 = vmand %vm289, %vm293
    %vm298 = vmand %vm290, %vm294
    %vm299 = vmand %vm291, %vm295
    %vm300 = vmand %vm292, %vm296
    %vm301 = vcmp.ge.s32.totalorder %v110, 32
    %vm302 = vcmp.lt.s32.totalorder %v110, 48
    %vm303 = vmand %vm301, %vm302
    %vm304 = vmand %vm297, %vm303
    %vm305 = vmand %vm298, %vm303
    %vm306 = vmand %vm299, %vm303
    %vm307 = vmand %vm300, %vm303
    %vm308 = vmor %vm285, %vm304
    %vm309 = vmor %vm286, %vm305
    %vm310 = vmor %vm287, %vm306
    %vm311 = vmor %vm288, %vm307
    %vm312 = vcmp.ge.s32.totalorder %v107, 24
    %vm313 = vcmp.ge.s32.totalorder %v108, 24
    %vm314 = vcmp.ge.s32.totalorder %v259, 24
    %vm315 = vcmp.ge.s32.totalorder %v260, 24
    %vm316 = vcmp.lt.s32.totalorder %v107, 32
    %vm317 = vcmp.lt.s32.totalorder %v108, 32
    %vm318 = vcmp.lt.s32.totalorder %v259, 32
    %vm319 = vcmp.lt.s32.totalorder %v260, 32
    %vm320 = vmand %vm312, %vm316
    %vm321 = vmand %vm313, %vm317
    %vm322 = vmand %vm314, %vm318
    %vm323 = vmand %vm315, %vm319
    %vm324 = vcmp.ge.s32.totalorder %v110, 48
    %vm325 = vcmp.lt.s32.totalorder %v110, 64
    %vm326 = vmand %vm324, %vm325
    %vm327 = vmand %vm320, %vm326
    %vm328 = vmand %vm321, %vm326
    %vm329 = vmand %vm322, %vm326
    %vm330 = vmand %vm323, %vm326
    %vm331 = vmor %vm308, %vm327
    %vm332 = vmor %vm309, %vm328
    %vm333 = vmor %vm310, %vm329
    %vm334 = vmor %vm311, %vm330
    %v335 = vsel %vm331, 1.0, 0.0
    %v336 = vsel %vm332, 1.0, 0.0
    %v337 = vsel %vm333, 1.0, 0.0
    %v338 = vsel %vm334, 1.0, 0.0
    %v339 = vmul.f32 %v255, %v335
    %v340 = vmul.f32 %v256, %v336
    %v341 = vmul.f32 %v257, %v337
    %v342 = vmul.f32 %v258, %v338
    %v343 = vmul.f32 %v101, 0.35355338
    %v344 = vmul.f32 %v104, 0.35355338
    %v346 = vsel %vm76, %v343, 0
    %v349 = vsel %vm76, %v344, 0
    %351 = vmatpush.msra.mxu0 0.0
    %352 = vmatpush.msra.mxu0 0.0
    %353 = vmatpush.msra.mxu0 0.0
    %354 = vmatpush.msra.mxu0 0.0
    %355 = vmatpush.msra.mxu0 0.0
    %356 = vmatpush.msra.mxu0 0.0
    %357 = vmatpush.msra.mxu0 0.0
    %358 = vmatpush.msra.mxu0 0.0
    %359 = vmatpush.msra.mxu0 0.0
    %360 = vmatpush.msra.mxu0 0.0
    %361 = vmatpush.msra.mxu0 0.0
    %362 = vmatpush.msra.mxu0 0.0
    %363 = vmatpush.msra.mxu0 %v342
    %364 = vmatpush.msra.mxu0 %v341
    %365 = vmatpush.msra.mxu0 %v340
    %366 = vmatpush.msra.mxu0 %v339
    %367 = vmatmul.f32.gmra.mxu0 %v346
    %v368 = vpop.f32.mrf.mxu0
    %v369 = vadd.f32 0.0, %v368
    %370 = vmatmul.f32.gmra.mxu0 %v349
    %v371 = vpop.f32.mrf.mxu0
    %v372 = vadd.f32 0.0, %v371
    %373 = vdwg.mxu0
    %vm374 = vcmp.gt.f32.partialorder %v165, 0.0
    %vm375 = vcmp.gt.f32.partialorder %v166, 0.0
    %v376 = vsel %vm374, -1000000.0, %v369
    %v377 = vsel %vm375, -1000000.0, %v372
    %vm378 = vcmask 523264
    %v379 = vsel %vm378, %v376, -inf
    %380 = vmax.xlane.f32.xlu0 %v379
    %v381 = vpop.xlane.xlu0 %380
    %v382 = vsel %vm378, %v377, -inf
    %383 = vmax.xlane.f32.xlu0 %v382
    %v384 = vpop.xlane.xlu0 %383
    %v385 = vsub.f32 %v376, %v381
    %v386 = vsub.f32 %v377, %v384
    %v387 = vmul.f32 %v385, 1.442695
    %v388 = vpow.pop %v387
    %v389 = vmul.f32 %v386, 1.442695
    %v390 = vpow.pop %v389
    %v391 = vadd.s32 %v107, 32
    %v392 = vadd.s32 %v107, 40
    %v393 = vadd.s32 %v107, 48
    %v394 = vadd.s32 %v107, 56
    %vm395 = vcmp.ge.s32.totalorder %v391, 0
    %vm396 = vcmp.ge.s32.totalorder %v392, 0
    %vm397 = vcmp.ge.s32.totalorder %v393, 0
    %vm398 = vcmp.ge.s32.totalorder %v394, 0
    %vm399 = vcmp.lt.s32.totalorder %v391, 16
    %vm400 = vcmp.lt.s32.totalorder %v392, 16
    %vm401 = vcmp.lt.s32.totalorder %v393, 16
    %vm402 = vcmp.lt.s32.totalorder %v394, 16
    %vm403 = vmand %vm111, %vm124
    %vm404 = vmand %vm112, %vm125
    %vm405 = vmand %vm261, %vm274
    %vm406 = vmand %vm262, %vm275
    %vm407 = vmand %vm395, %vm399
    %vm408 = vmand %vm396, %vm400
    %vm409 = vmand %vm397, %vm401
    %vm410 = vmand %vm398, %vm402
    %vm411 = vmand %vm403, %vm119
    %vm412 = vmand %vm404, %vm119
    %vm413 = vmand %vm405, %vm119
    %vm414 = vmand %vm406, %vm119
    %vm415 = vmand %vm407, %vm119
    %vm416 = vmand %vm408, %vm119
    %vm417 = vmand %vm409, %vm119
    %vm418 = vmand %vm410, %vm119
    %vm419 = vcmp.ge.s32.totalorder %v391, 16
    %vm420 = vcmp.ge.s32.totalorder %v392, 16
    %vm421 = vcmp.ge.s32.totalorder %v393, 16
    %vm422 = vcmp.ge.s32.totalorder %v394, 16
    %vm423 = vcmp.lt.s32.totalorder %v391, 32
    %vm424 = vcmp.lt.s32.totalorder %v392, 32
    %vm425 = vcmp.lt.s32.totalorder %v393, 32
    %vm426 = vcmp.lt.s32.totalorder %v394, 32
    %vm427 = vmand %vm289, %vm316
    %vm428 = vmand %vm290, %vm317
    %vm429 = vmand %vm291, %vm318
    %vm430 = vmand %vm292, %vm319
    %vm431 = vmand %vm419, %vm423
    %vm432 = vmand %vm420, %vm424
    %vm433 = vmand %vm421, %vm425
    %vm434 = vmand %vm422, %vm426
    %vm435 = vmand %vm427, %vm130
    %vm436 = vmand %vm428, %vm130
    %vm437 = vmand %vm429, %vm130
    %vm438 = vmand %vm430, %vm130
    %vm439 = vmand %vm431, %vm130
    %vm440 = vmand %vm432, %vm130
    %vm441 = vmand %vm433, %vm130
    %vm442 = vmand %vm434, %vm130
    %vm443 = vmor %vm411, %vm435
    %vm444 = vmor %vm412, %vm436
    %vm445 = vmor %vm413, %vm437
    %vm446 = vmor %vm414, %vm438
    %vm447 = vmor %vm415, %vm439
    %vm448 = vmor %vm416, %vm440
    %vm449 = vmor %vm417, %vm441
    %vm450 = vmor %vm418, %vm442
    %vm451 = vcmp.ge.s32.totalorder %v107, 32
    %vm452 = vcmp.ge.s32.totalorder %v108, 32
    %vm453 = vcmp.ge.s32.totalorder %v259, 32
    %vm454 = vcmp.ge.s32.totalorder %v260, 32
    %vm455 = vcmp.ge.s32.totalorder %v391, 32
    %vm456 = vcmp.ge.s32.totalorder %v392, 32
    %vm457 = vcmp.ge.s32.totalorder %v393, 32
    %vm458 = vcmp.ge.s32.totalorder %v394, 32
    %vm459 = vcmp.lt.s32.totalorder %v107, 48
    %vm460 = vcmp.lt.s32.totalorder %v108, 48
    %vm461 = vcmp.lt.s32.totalorder %v259, 48
    %vm462 = vcmp.lt.s32.totalorder %v260, 48
    %vm463 = vcmp.lt.s32.totalorder %v391, 48
    %vm464 = vcmp.lt.s32.totalorder %v392, 48
    %vm465 = vcmp.lt.s32.totalorder %v393, 48
    %vm466 = vcmp.lt.s32.totalorder %v394, 48
    %vm467 = vmand %vm451, %vm459
    %vm468 = vmand %vm452, %vm460
    %vm469 = vmand %vm453, %vm461
    %vm470 = vmand %vm454, %vm462
    %vm471 = vmand %vm455, %vm463
    %vm472 = vmand %vm456, %vm464
    %vm473 = vmand %vm457, %vm465
    %vm474 = vmand %vm458, %vm466
    %vm475 = vcmp.lt.s32.totalorder %v110, 24
    %vm476 = vmand %vm278, %vm475
    %vm477 = vmand %vm467, %vm476
    %vm478 = vmand %vm468, %vm476
    %vm479 = vmand %vm469, %vm476
    %vm480 = vmand %vm470, %vm476
    %vm481 = vmand %vm471, %vm476
    %vm482 = vmand %vm472, %vm476
    %vm483 = vmand %vm473, %vm476
    %vm484 = vmand %vm474, %vm476
    %vm485 = vmor %vm443, %vm477
    %vm486 = vmor %vm444, %vm478
    %vm487 = vmor %vm445, %vm479
    %vm488 = vmor %vm446, %vm480
    %vm489 = vmor %vm447, %vm481
    %vm490 = vmor %vm448, %vm482
    %vm491 = vmor %vm449, %vm483
    %vm492 = vmor %vm450, %vm484
    %vm493 = vcmp.ge.s32.totalorder %v107, 48
    %vm494 = vcmp.ge.s32.totalorder %v108, 48
    %vm495 = vcmp.ge.s32.totalorder %v259, 48
    %vm496 = vcmp.ge.s32.totalorder %v260, 48
    %vm497 = vcmp.ge.s32.totalorder %v391, 48
    %vm498 = vcmp.ge.s32.totalorder %v392, 48
    %vm499 = vcmp.ge.s32.totalorder %v393, 48
    %vm500 = vcmp.ge.s32.totalorder %v394, 48
    %vm501 = vcmp.lt.s32.totalorder %v107, 64
    %vm502 = vcmp.lt.s32.totalorder %v108, 64
    %vm503 = vcmp.lt.s32.totalorder %v259, 64
    %vm504 = vcmp.lt.s32.totalorder %v260, 64
    %vm505 = vcmp.lt.s32.totalorder %v391, 64
    %vm506 = vcmp.lt.s32.totalorder %v392, 64
    %vm507 = vcmp.lt.s32.totalorder %v393, 64
    %vm508 = vcmp.lt.s32.totalorder %v394, 64
    %vm509 = vmand %vm493, %vm501
    %vm510 = vmand %vm494, %vm502
    %vm511 = vmand %vm495, %vm503
    %vm512 = vmand %vm496, %vm504
    %vm513 = vmand %vm497, %vm505
    %vm514 = vmand %vm498, %vm506
    %vm515 = vmand %vm499, %vm507
    %vm516 = vmand %vm500, %vm508
    %vm517 = vcmp.ge.s32.totalorder %v110, 24
    %vm518 = vmand %vm517, %vm279
    %vm519 = vmand %vm509, %vm518
    %vm520 = vmand %vm510, %vm518
    %vm521 = vmand %vm511, %vm518
    %vm522 = vmand %vm512, %vm518
    %vm523 = vmand %vm513, %vm518
    %vm524 = vmand %vm514, %vm518
    %vm525 = vmand %vm515, %vm518
    %vm526 = vmand %vm516, %vm518
    %vm527 = vmor %vm485, %vm519
    %vm528 = vmor %vm486, %vm520
    %vm529 = vmor %vm487, %vm521
    %vm530 = vmor %vm488, %vm522
    %vm531 = vmor %vm489, %vm523
    %vm532 = vmor %vm490, %vm524
    %vm533 = vmor %vm491, %vm525
    %vm534 = vmor %vm492, %vm526
    %v535 = vsel %vm527, 1.0, 0.0
    %v536 = vsel %vm528, 1.0, 0.0
    %v537 = vsel %vm529, 1.0, 0.0
    %v538 = vsel %vm530, 1.0, 0.0
    %v539 = vsel %vm531, 1.0, 0.0
    %v540 = vsel %vm532, 1.0, 0.0
    %v541 = vsel %vm533, 1.0, 0.0
    %v542 = vsel %vm534, 1.0, 0.0
    %551 = vrot.lane.b32.xlu0 %v535, 64
    %v552 = vpop.permute.xlu0 %551
    %553 = vrot.lane.b32.xlu0 %v536, 64
    %v554 = vpop.permute.xlu0 %553
    %555 = vrot.lane.b32.xlu0 %v537, 64
    %v556 = vpop.permute.xlu0 %555
    %557 = vrot.lane.b32.xlu0 %v538, 64
    %v558 = vpop.permute.xlu0 %557
    %559 = vrot.lane.b32.xlu0 %v539, 64
    %v560 = vpop.permute.xlu0 %559
    %561 = vrot.lane.b32.xlu0 %v540, 64
    %v562 = vpop.permute.xlu0 %561
    %563 = vrot.lane.b32.xlu0 %v541, 64
    %v564 = vpop.permute.xlu0 %563
    %565 = vrot.lane.b32.xlu0 %v542, 64
    %v566 = vpop.permute.xlu0 %565
    %v575 = vmul.f32 %v101, %v552
    %v576 = vmul.f32 %v104, %v554
    %v577 = vmul.f32 %v101, %v556
    %v578 = vmul.f32 %v104, %v558
    %v579 = vmul.f32 %v101, %v560
    %v580 = vmul.f32 %v104, %v562
    %v581 = vmul.f32 %v101, %v564
    %v582 = vmul.f32 %v104, %v566
    %591 = vrot.lane.b32.xlu0 %v575, 64
    %v592 = vpop.permute.xlu0 %591
    %593 = vrot.lane.b32.xlu0 %v576, 64
    %v594 = vpop.permute.xlu0 %593
    %595 = vrot.lane.b32.xlu0 %v577, 64
    %v596 = vpop.permute.xlu0 %595
    %597 = vrot.lane.b32.xlu0 %v578, 64
    %v598 = vpop.permute.xlu0 %597
    %599 = vrot.lane.b32.xlu0 %v579, 64
    %v600 = vpop.permute.xlu0 %599
    %601 = vrot.lane.b32.xlu0 %v580, 64
    %v602 = vpop.permute.xlu0 %601
    %603 = vrot.lane.b32.xlu0 %v581, 64
    %v604 = vpop.permute.xlu0 %603
    %605 = vrot.lane.b32.xlu0 %v582, 64
    %v606 = vpop.permute.xlu0 %605
    %615 = vrot.lane.b32.xlu0 %v535, 32
    %v616 = vpop.permute.xlu0 %615
    %617 = vrot.lane.b32.xlu0 %v536, 32
    %v618 = vpop.permute.xlu0 %617
    %619 = vrot.lane.b32.xlu0 %v537, 32
    %v620 = vpop.permute.xlu0 %619
    %621 = vrot.lane.b32.xlu0 %v538, 32
    %v622 = vpop.permute.xlu0 %621
    %623 = vrot.lane.b32.xlu0 %v539, 32
    %v624 = vpop.permute.xlu0 %623
    %625 = vrot.lane.b32.xlu0 %v540, 32
    %v626 = vpop.permute.xlu0 %625
    %627 = vrot.lane.b32.xlu0 %v541, 32
    %v628 = vpop.permute.xlu0 %627
    %629 = vrot.lane.b32.xlu0 %v542, 32
    %v630 = vpop.permute.xlu0 %629
    %v639 = vsel %vm76, %v592, %v616
    %v640 = vsel %vm76, %v594, %v618
    %v641 = vsel %vm76, %v596, %v620
    %v642 = vsel %vm76, %v598, %v622
    %v643 = vsel %vm76, %v600, %v624
    %v644 = vsel %vm76, %v602, %v626
    %v645 = vsel %vm76, %v604, %v628
    %v646 = vsel %vm76, %v606, %v630
    %v648 = vsel %vm378, %v388, 0
    %v651 = vsel %vm378, %v390, 0
    %653 = vmatpush.msra.mxu0 0.0
    %654 = vmatpush.msra.mxu0 0.0
    %655 = vmatpush.msra.mxu0 0.0
    %656 = vmatpush.msra.mxu0 0.0
    %657 = vmatpush.msra.mxu0 0.0
    %658 = vmatpush.msra.mxu0 0.0
    %659 = vmatpush.msra.mxu0 0.0
    %660 = vmatpush.msra.mxu0 0.0
    %661 = vmatpush.msra.mxu0 %v646
    %662 = vmatpush.msra.mxu0 %v645
    %663 = vmatpush.msra.mxu0 %v644
    %664 = vmatpush.msra.mxu0 %v643
    %665 = vmatpush.msra.mxu0 %v642
    %666 = vmatpush.msra.mxu0 %v641
    %667 = vmatpush.msra.mxu0 %v640
    %668 = vmatpush.msra.mxu0 %v639
    %669 = vmatmul.f32.gmra.mxu0 %v648
    %v670 = vpop.f32.mrf.mxu0
    %v671 = vadd.f32 0.0, %v670
    %672 = vmatmul.f32.gmra.mxu0 %v651
    %v673 = vpop.f32.mrf.mxu0
    %v674 = vadd.f32 0.0, %v673
    %675 = vdwg.mxu0
    %v676 = vrcp.pop %v671
    %v677 = vrcp.pop %v674
    %v678 = vmul.f32 %v671, %v676
    %v679 = vmul.f32 %v674, %v677
    %v680 = vsub.f32 2.0, %v678
    %v681 = vsub.f32 2.0, %v679
    %v682 = vmul.f32 %v676, %v680
    %v683 = vmul.f32 %v677, %v681
    %686 = vrot.lane.b32.xlu0 %v682, 96
    %v687 = vpop.permute.xlu0 %686
    %688 = vrot.lane.b32.xlu0 %v683, 96
    %v689 = vpop.permute.xlu0 %688
    %v692 = vmul.f32 %v671, %v687
    %v693 = vmul.f32 %v674, %v689
    %v695 = vsel %vm76, %v692, 0
    %v698 = vsel %vm76, %v693, 0
    %700 = vmatpush.msra.mxu0 0.0
    %701 = vmatpush.msra.mxu0 0.0
    %702 = vmatpush.msra.mxu0 0.0
    %703 = vmatpush.msra.mxu0 0.0
    %704 = vmatpush.msra.mxu0 0.0
    %705 = vmatpush.msra.mxu0 0.0
    %706 = vmatpush.msra.mxu0 0.0
    %707 = vmatpush.msra.mxu0 0.0
    %708 = vmatpush.msra.mxu0 0.0
    %709 = vmatpush.msra.mxu0 0.0
    %710 = vmatpush.msra.mxu0 0.0
    %711 = vmatpush.msra.mxu0 0.0
    %712 = vmatpush.msra.mxu0 %v70
    %713 = vmatpush.msra.mxu0 %v64
    %714 = vmatpush.msra.mxu0 %v58
    %715 = vmatpush.msra.mxu0 %v52
    %716 = vmatmul.f32.gmra.mxu0 %v695
    %v717 = vpop.f32.mrf.mxu0
    %v718 = vadd.f32 0.0, %v717
    %719 = vmatmul.f32.gmra.mxu0 %v698
    %v720 = vpop.f32.mrf.mxu0
    %v721 = vadd.f32 0.0, %v720
    %722 = vdwg.mxu0
    %v723 = vadd.f32 %v46, %v718
    %v724 = vadd.f32 %v47, %v721
    %v725 = vsel %vm76, %v723, 0.0
    %726 = vadd.xlane.f32.xlu0 %v725
    %v727 = vpop.xlane.xlu0 %726
    %v728 = vsel %vm76, %v724, 0.0
    %729 = vadd.xlane.f32.xlu0 %v728
    %v730 = vpop.xlane.xlu0 %729
    %v731 = vrcp.pop 32.0
    %v732 = vmul.f32 32.0, %v731
    %v733 = vsub.f32 1.0, %v732
    %v734 = vmul.f32 %v731, %v733
    %v735 = vadd.f32 %v731, %v734
    %vm736 = vweird.f32 %v731
    %v737 = vsel %vm736, %v731, %v735
    %v738 = vmul.f32 %v727, %v737
    %v739 = vmul.f32 %v730, %v737
    %v740 = vsub.f32 %v723, %v738
    %v741 = vsub.f32 %v724, %v739
    %v742 = vmul.f32 %v740, %v740
    %v743 = vmul.f32 %v741, %v741
    %v744 = vsel %vm76, %v742, 0.0
    %745 = vadd.xlane.f32.xlu0 %v744
    %v746 = vpop.xlane.xlu0 %745
    %v747 = vsel %vm76, %v743, 0.0
    %748 = vadd.xlane.f32.xlu0 %v747
    %v749 = vpop.xlane.xlu0 %748
    %v750 = vmul.f32 %v746, %v737
    %v751 = vmul.f32 %v749, %v737
    %v752 = vadd.f32 %v750, 1e-05
    %v753 = vadd.f32 %v751, 1e-05
    %v754 = vrsqrt.pop %v752
    %v755 = vmul.f32 %v754, %v752
    %v756 = vmul.f32 %v755, %v754
    %v757 = vmul.f32 0.5, %v756
    %v758 = vsub.f32 1.5, %v757
    %v759 = vmul.f32 %v754, %v758
    %vm760 = vweird.f32 %v752
    %vm761 = vweird.f32 %v754
    %vm762 = vmor %vm760, %vm761
    %v763 = vsel %vm762, %v754, %v759
    %v764 = vrsqrt.pop %v753
    %v765 = vmul.f32 %v764, %v753
    %v766 = vmul.f32 %v765, %v764
    %v767 = vmul.f32 0.5, %v766
    %v768 = vsub.f32 1.5, %v767
    %v769 = vmul.f32 %v764, %v768
    %vm770 = vweird.f32 %v753
    %vm771 = vweird.f32 %v764
    %vm772 = vmor %vm770, %vm771
    %v773 = vsel %vm772, %v764, %v769
    %v774 = vmul.f32 %v740, %v763
    %v775 = vmul.f32 %v741, %v773
    %v776 = vperm.slane %v75, 0
    %v777 = vmul.f32 %v774, %v776
    %v778 = vmul.f32 %v775, %v776
    %v779 = vperm.slane %v75, 1
    %v780 = vadd.f32 %v777, %v779
    %v781 = vadd.f32 %v778, %v779
    %v783 = vsel %vm76, %v780, 0
    %v786 = vsel %vm76, %v781, 0
    %788 = vmatpush.msra.mxu0 0.0
    %789 = vmatpush.msra.mxu0 0.0
    %790 = vmatpush.msra.mxu0 0.0
    %791 = vmatpush.msra.mxu0 0.0
    %792 = vmatpush.msra.mxu0 0.0
    %793 = vmatpush.msra.mxu0 0.0
    %794 = vmatpush.msra.mxu0 0.0
    %795 = vmatpush.msra.mxu0 0.0
    %796 = vmatpush.msra.mxu0 0.0
    %797 = vmatpush.msra.mxu0 0.0
    %798 = vmatpush.msra.mxu0 0.0
    %799 = vmatpush.msra.mxu0 0.0
    %800 = vmatpush.msra.mxu0 %v71
    %801 = vmatpush.msra.mxu0 %v65
    %802 = vmatpush.msra.mxu0 %v59
    %803 = vmatpush.msra.mxu0 %v53
    %804 = vmatmul.f32.gmra.mxu0 %v783
    %v805 = vpop.f32.mrf.mxu0
    %v806 = vadd.f32 0.0, %v805
    %807 = vmatmul.f32.gmra.mxu0 %v786
    %v808 = vpop.f32.mrf.mxu0
    %v809 = vadd.f32 0.0, %v808
    %810 = vdwg.mxu0
    %v812 = vsel %vm76, %v48, 0
    %v815 = vsel %vm76, %v49, 0
    %v818 = vsel %vm76, %v50, 0
    %820 = vmatpush.msra.mxu0 0.0
    %821 = vmatpush.msra.mxu0 0.0
    %822 = vmatpush.msra.mxu0 0.0
    %823 = vmatpush.msra.mxu0 0.0
    %824 = vmatpush.msra.mxu0 0.0
    %825 = vmatpush.msra.mxu0 0.0
    %826 = vmatpush.msra.mxu0 0.0
    %827 = vmatpush.msra.mxu0 0.0
    %828 = vmatpush.msra.mxu0 0.0
    %829 = vmatpush.msra.mxu0 0.0
    %830 = vmatpush.msra.mxu0 0.0
    %831 = vmatpush.msra.mxu0 0.0
    %832 = vmatpush.msra.mxu0 %v72
    %833 = vmatpush.msra.mxu0 %v66
    %834 = vmatpush.msra.mxu0 %v60
    %835 = vmatpush.msra.mxu0 %v54
    %836 = vmatmul.f32.gmra.mxu0 %v812
    %v837 = vpop.f32.mrf.mxu0
    %v838 = vadd.f32 0.0, %v837
    %839 = vmatmul.f32.gmra.mxu0 %v815
    %v840 = vpop.f32.mrf.mxu0
    %v841 = vadd.f32 0.0, %v840
    %842 = vmatmul.f32.gmra.mxu0 %v818
    %v843 = vpop.f32.mrf.mxu0
    %v844 = vadd.f32 0.0, %v843
    %845 = vdwg.mxu0
    %s846 = sld [smem:[#allocation3]]
    %v847 = vstv %s846
    %vm848 = vcmp.lt.s32.totalorder %v110, 12
    %vm849 = vmand %vm117, %vm848
    %vm850 = vmand %vm115, %vm849
    %vm851 = vmand %vm116, %vm849
    %vm852 = vcmp.ge.s32.totalorder %v110, 12
    %vm853 = vmand %vm852, %vm475
    %vm854 = vmand %vm126, %vm853
    %vm855 = vmand %vm127, %vm853
    %vm856 = vmor %vm850, %vm854
    %vm857 = vmor %vm851, %vm855
    %v858 = vsub.s32 %v110, 12
    %v859 = vsel %vm853, %v858, %v110
    %s860 = sld [smem:[#allocation3 + $0x1]]
    %v861 = vstv %s860
    %v862 = vsel %vm853, %v861, %v847
    %vm863 = vmxor %vm856, 1
    %vm864 = vmxor %vm857, 1
    %vm865 = vcmp.ge.s32.totalorder %v859, %v862
    %vm866 = vmor %vm863, %vm865
    %vm867 = vmor %vm864, %vm865
    %v868 = vsel %vm866, 1.0, 0.0
    %v869 = vsel %vm867, 1.0, 0.0
    %872 = vrot.lane.b32.xlu0 %v868, 24
    %v873 = vpop.permute.xlu0 %872
    %874 = vrot.lane.b32.xlu0 %v869, 24
    %v875 = vpop.permute.xlu0 %874
    %878 = vrot.lane.b32.xlu0 %v868, 48
    %v879 = vpop.permute.xlu0 %878
    %880 = vrot.lane.b32.xlu0 %v869, 48
    %v881 = vpop.permute.xlu0 %880
    %884 = vrot.lane.b32.xlu0 %v868, 72
    %v885 = vpop.permute.xlu0 %884
    %886 = vrot.lane.b32.xlu0 %v869, 72
    %v887 = vpop.permute.xlu0 %886
    %vm890 = vcmask 195584
    %v891 = vsel %vm890, %v868, %v873
    %v892 = vsel %vm890, %v869, %v875
    %v893 = vsel %vm164, %v891, %v879
    %v894 = vsel %vm164, %v892, %v881
    %vm895 = vcmask 588800
    %v896 = vsel %vm895, %v893, %v885
    %v897 = vsel %vm895, %v894, %v887
    %898 = vxpose.xlu0.b32.start [1/16] %v838, 128
    %899 = vxpose.xlu0.b32.cont [2/16] %v841, 128
    %900 = vxpose.xlu0.b32.cont [3/16] %v844, 128
    %901 = vxpose.xlu0.b32.cont [4/16] 0.0, 128
    %902 = vxpose.xlu0.b32.cont [5/16] 0.0, 128
    %903 = vxpose.xlu0.b32.cont [6/16] 0.0, 128
    %904 = vxpose.xlu0.b32.cont [7/16] 0.0, 128
    %905 = vxpose.xlu0.b32.cont [8/16] 0.0, 128
    %906 = vxpose.xlu0.b32.cont [9/16] 0.0, 128
    %907 = vxpose.xlu0.b32.cont [10/16] 0.0, 128
    %908 = vxpose.xlu0.b32.cont [11/16] 0.0, 128
    %909 = vxpose.xlu0.b32.cont [12/16] 0.0, 128
    %910 = vxpose.xlu0.b32.cont [13/16] 0.0, 128
    %911 = vxpose.xlu0.b32.cont [14/16] 0.0, 128
    %912 = vxpose.xlu0.b32.cont [15/16] 0.0, 128
    %913 = vxpose.xlu0.b32.end [16/16] 0.0, 128
    %v914 = vpop.trf.xlu0
    %v915 = vpop.trf.xlu0
    %v916 = vpop.trf.xlu0
    %v917 = vpop.trf.xlu0
    %v918 = vpop.trf.xlu0
    %v919 = vpop.trf.xlu0
    %v920 = vpop.trf.xlu0
    %v921 = vpop.trf.xlu0
    %v922 = vpop.trf.xlu0
    %v923 = vpop.trf.xlu0
    %v924 = vpop.trf.xlu0
    %v925 = vpop.trf.xlu0
    %v926 = vpop.trf.xlu0
    %v927 = vpop.trf.xlu0
    %v928 = vpop.trf.xlu0
    %v929 = vpop.trf.xlu0
    %934 = vrot.lane.b32.xlu0 %v914, 24
    %v935 = vpop.permute.xlu0 %934
    %936 = vrot.lane.b32.xlu0 %v915, 24
    %v937 = vpop.permute.xlu0 %936
    %938 = vrot.lane.b32.xlu0 %v916, 24
    %v939 = vpop.permute.xlu0 %938
    %940 = vrot.lane.b32.xlu0 %v917, 24
    %v941 = vpop.permute.xlu0 %940
    %946 = vrot.lane.b32.xlu0 %v914, 48
    %v947 = vpop.permute.xlu0 %946
    %948 = vrot.lane.b32.xlu0 %v915, 48
    %v949 = vpop.permute.xlu0 %948
    %950 = vrot.lane.b32.xlu0 %v916, 48
    %v951 = vpop.permute.xlu0 %950
    %952 = vrot.lane.b32.xlu0 %v917, 48
    %v953 = vpop.permute.xlu0 %952
    %958 = vrot.lane.b32.xlu0 %v914, 72
    %v959 = vpop.permute.xlu0 %958
    %960 = vrot.lane.b32.xlu0 %v915, 72
    %v961 = vpop.permute.xlu0 %960
    %962 = vrot.lane.b32.xlu0 %v916, 72
    %v963 = vpop.permute.xlu0 %962
    %964 = vrot.lane.b32.xlu0 %v917, 72
    %v965 = vpop.permute.xlu0 %964
    %v970 = vsel %vm890, %v914, %v935
    %v971 = vsel %vm890, %v915, %v937
    %v972 = vsel %vm890, %v916, %v939
    %v973 = vsel %vm890, %v917, %v941
    %v974 = vsel %vm164, %v970, %v947
    %v975 = vsel %vm164, %v971, %v949
    %v976 = vsel %vm164, %v972, %v951
    %v977 = vsel %vm164, %v973, %v953
    %v978 = vsel %vm895, %v974, %v959
    %v979 = vsel %vm895, %v975, %v961
    %v980 = vsel %vm895, %v976, %v963
    %v981 = vsel %vm895, %v977, %v965
    %vm982 = vmand %vm117, %vm475
    %vm983 = vmand %vm115, %vm982
    %vm984 = vmand %vm116, %vm982
    %vm985 = vmand %vm265, %vm982
    %vm986 = vmand %vm266, %vm982
    %vm987 = vmand %vm517, %vm302
    %vm988 = vmand %vm126, %vm987
    %vm989 = vmand %vm127, %vm987
    %vm990 = vmand %vm276, %vm987
    %vm991 = vmand %vm277, %vm987
    %vm992 = vmor %vm983, %vm988
    %vm993 = vmor %vm984, %vm989
    %vm994 = vmor %vm985, %vm990
    %vm995 = vmor %vm986, %vm991
    %vm996 = vcmp.lt.s32.totalorder %v110, 72
    %vm997 = vmand %vm324, %vm996
    %vm998 = vmand %vm297, %vm997
    %vm999 = vmand %vm298, %vm997
    %vm1000 = vmand %vm299, %vm997
    %vm1001 = vmand %vm300, %vm997
    %vm1002 = vmor %vm992, %vm998
    %vm1003 = vmor %vm993, %vm999
    %vm1004 = vmor %vm994, %vm1000
    %vm1005 = vmor %vm995, %vm1001
    %vm1006 = vcmp.ge.s32.totalorder %v110, 72
    %vm1007 = vcmp.lt.s32.totalorder %v110, 96
    %vm1008 = vmand %vm1006, %vm1007
    %vm1009 = vmand %vm320, %vm1008
    %vm1010 = vmand %vm321, %vm1008
    %vm1011 = vmand %vm322, %vm1008
    %vm1012 = vmand %vm323, %vm1008
    %vm1013 = vmor %vm1002, %vm1009
    %vm1014 = vmor %vm1003, %vm1010
    %vm1015 = vmor %vm1004, %vm1011
    %vm1016 = vmor %vm1005, %vm1012
    %v1017 = vsel %vm1013, 1.0, 0.0
    %v1018 = vsel %vm1014, 1.0, 0.0
    %v1019 = vsel %vm1015, 1.0, 0.0
    %v1020 = vsel %vm1016, 1.0, 0.0
    %v1021 = vmul.f32 %v978, %v1017
    %v1022 = vmul.f32 %v979, %v1018
    %v1023 = vmul.f32 %v980, %v1019
    %v1024 = vmul.f32 %v981, %v1020
    %v1025 = vmul.f32 %v806, 0.35355338
    %v1026 = vmul.f32 %v809, 0.35355338
    %v1028 = vsel %vm76, %v1025, 0
    %v1031 = vsel %vm76, %v1026, 0
    %1033 = vmatpush.msra.mxu0 0.0
    %1034 = vmatpush.msra.mxu0 0.0
    %1035 = vmatpush.msra.mxu0 0.0
    %1036 = vmatpush.msra.mxu0 0.0
    %1037 = vmatpush.msra.mxu0 0.0
    %1038 = vmatpush.msra.mxu0 0.0
    %1039 = vmatpush.msra.mxu0 0.0
    %1040 = vmatpush.msra.mxu0 0.0
    %1041 = vmatpush.msra.mxu0 0.0
    %1042 = vmatpush.msra.mxu0 0.0
    %1043 = vmatpush.msra.mxu0 0.0
    %1044 = vmatpush.msra.mxu0 0.0
    %1045 = vmatpush.msra.mxu0 %v1024
    %1046 = vmatpush.msra.mxu0 %v1023
    %1047 = vmatpush.msra.mxu0 %v1022
    %1048 = vmatpush.msra.mxu0 %v1021
    %1049 = vmatmul.f32.gmra.mxu0 %v1028
    %v1050 = vpop.f32.mrf.mxu0
    %v1051 = vadd.f32 0.0, %v1050
    %1052 = vmatmul.f32.gmra.mxu0 %v1031
    %v1053 = vpop.f32.mrf.mxu0
    %v1054 = vadd.f32 0.0, %v1053
    %1055 = vdwg.mxu0
    %vm1056 = vcmp.gt.f32.partialorder %v896, 0.0
    %vm1057 = vcmp.gt.f32.partialorder %v897, 0.0
    %v1058 = vsel %vm1056, -1000000.0, %v1051
    %v1059 = vsel %vm1057, -1000000.0, %v1054
    %vm1060 = vcmask 785408
    %v1061 = vsel %vm1060, %v1058, -inf
    %1062 = vmax.xlane.f32.xlu0 %v1061
    %v1063 = vpop.xlane.xlu0 %1062
    %v1064 = vsel %vm1060, %v1059, -inf
    %1065 = vmax.xlane.f32.xlu0 %v1064
    %v1066 = vpop.xlane.xlu0 %1065
    %v1067 = vsub.f32 %v1058, %v1063
    %v1068 = vsub.f32 %v1059, %v1066
    %v1069 = vmul.f32 %v1067, 1.442695
    %v1070 = vpow.pop %v1069
    %v1071 = vmul.f32 %v1068, 1.442695
    %v1072 = vpow.pop %v1071
    %v1073 = vadd.s32 %v107, 64
    %v1074 = vadd.s32 %v107, 72
    %v1075 = vadd.s32 %v107, 80
    %v1076 = vadd.s32 %v107, 88
    %vm1077 = vcmp.ge.s32.totalorder %v1073, 0
    %vm1078 = vcmp.ge.s32.totalorder %v1074, 0
    %vm1079 = vcmp.ge.s32.totalorder %v1075, 0
    %vm1080 = vcmp.ge.s32.totalorder %v1076, 0
    %vm1081 = vcmp.lt.s32.totalorder %v391, 24
    %vm1082 = vcmp.lt.s32.totalorder %v392, 24
    %vm1083 = vcmp.lt.s32.totalorder %v393, 24
    %vm1084 = vcmp.lt.s32.totalorder %v394, 24
    %vm1085 = vcmp.lt.s32.totalorder %v1073, 24
    %vm1086 = vcmp.lt.s32.totalorder %v1074, 24
    %vm1087 = vcmp.lt.s32.totalorder %v1075, 24
    %vm1088 = vcmp.lt.s32.totalorder %v1076, 24
    %vm1089 = vmand %vm111, %vm293
    %vm1090 = vmand %vm112, %vm294
    %vm1091 = vmand %vm261, %vm295
    %vm1092 = vmand %vm262, %vm296
    %vm1093 = vmand %vm395, %vm1081
    %vm1094 = vmand %vm396, %vm1082
    %vm1095 = vmand %vm397, %vm1083
    %vm1096 = vmand %vm398, %vm1084
    %vm1097 = vmand %vm1077, %vm1085
    %vm1098 = vmand %vm1078, %vm1086
    %vm1099 = vmand %vm1079, %vm1087
    %vm1100 = vmand %vm1080, %vm1088
    %vm1101 = vmand %vm1089, %vm119
    %vm1102 = vmand %vm1090, %vm119
    %vm1103 = vmand %vm1091, %vm119
    %vm1104 = vmand %vm1092, %vm119
    %vm1105 = vmand %vm1093, %vm119
    %vm1106 = vmand %vm1094, %vm119
    %vm1107 = vmand %vm1095, %vm119
    %vm1108 = vmand %vm1096, %vm119
    %vm1109 = vmand %vm1097, %vm119
    %vm1110 = vmand %vm1098, %vm119
    %vm1111 = vmand %vm1099, %vm119
    %vm1112 = vmand %vm1100, %vm119
    %vm1113 = vcmp.ge.s32.totalorder %v391, 24
    %vm1114 = vcmp.ge.s32.totalorder %v392, 24
    %vm1115 = vcmp.ge.s32.totalorder %v393, 24
    %vm1116 = vcmp.ge.s32.totalorder %v394, 24
    %vm1117 = vcmp.ge.s32.totalorder %v1073, 24
    %vm1118 = vcmp.ge.s32.totalorder %v1074, 24
    %vm1119 = vcmp.ge.s32.totalorder %v1075, 24
    %vm1120 = vcmp.ge.s32.totalorder %v1076, 24
    %vm1121 = vcmp.lt.s32.totalorder %v1073, 48
    %vm1122 = vcmp.lt.s32.totalorder %v1074, 48
    %vm1123 = vcmp.lt.s32.totalorder %v1075, 48
    %vm1124 = vcmp.lt.s32.totalorder %v1076, 48
    %vm1125 = vmand %vm312, %vm459
    %vm1126 = vmand %vm313, %vm460
    %vm1127 = vmand %vm314, %vm461
    %vm1128 = vmand %vm315, %vm462
    %vm1129 = vmand %vm1113, %vm463
    %vm1130 = vmand %vm1114, %vm464
    %vm1131 = vmand %vm1115, %vm465
    %vm1132 = vmand %vm1116, %vm466
    %vm1133 = vmand %vm1117, %vm1121
    %vm1134 = vmand %vm1118, %vm1122
    %vm1135 = vmand %vm1119, %vm1123
    %vm1136 = vmand %vm1120, %vm1124
    %vm1137 = vmand %vm1125, %vm130
    %vm1138 = vmand %vm1126, %vm130
    %vm1139 = vmand %vm1127, %vm130
    %vm1140 = vmand %vm1128, %vm130
    %vm1141 = vmand %vm1129, %vm130
    %vm1142 = vmand %vm1130, %vm130
    %vm1143 = vmand %vm1131, %vm130
    %vm1144 = vmand %vm1132, %vm130
    %vm1145 = vmand %vm1133, %vm130
    %vm1146 = vmand %vm1134, %vm130
    %vm1147 = vmand %vm1135, %vm130
    %vm1148 = vmand %vm1136, %vm130
    %vm1149 = vmor %vm1101, %vm1137
    %vm1150 = vmor %vm1102, %vm1138
    %vm1151 = vmor %vm1103, %vm1139
    %vm1152 = vmor %vm1104, %vm1140
    %vm1153 = vmor %vm1105, %vm1141
    %vm1154 = vmor %vm1106, %vm1142
    %vm1155 = vmor %vm1107, %vm1143
    %vm1156 = vmor %vm1108, %vm1144
    %vm1157 = vmor %vm1109, %vm1145
    %vm1158 = vmor %vm1110, %vm1146
    %vm1159 = vmor %vm1111, %vm1147
    %vm1160 = vmor %vm1112, %vm1148
    %vm1161 = vcmp.ge.s32.totalorder %v1073, 48
    %vm1162 = vcmp.ge.s32.totalorder %v1074, 48
    %vm1163 = vcmp.ge.s32.totalorder %v1075, 48
    %vm1164 = vcmp.ge.s32.totalorder %v1076, 48
    %vm1165 = vcmp.lt.s32.totalorder %v107, 72
    %vm1166 = vcmp.lt.s32.totalorder %v108, 72
    %vm1167 = vcmp.lt.s32.totalorder %v259, 72
    %vm1168 = vcmp.lt.s32.totalorder %v260, 72
    %vm1169 = vcmp.lt.s32.totalorder %v391, 72
    %vm1170 = vcmp.lt.s32.totalorder %v392, 72
    %vm1171 = vcmp.lt.s32.totalorder %v393, 72
    %vm1172 = vcmp.lt.s32.totalorder %v394, 72
    %vm1173 = vcmp.lt.s32.totalorder %v1073, 72
    %vm1174 = vcmp.lt.s32.totalorder %v1074, 72
    %vm1175 = vcmp.lt.s32.totalorder %v1075, 72
    %vm1176 = vcmp.lt.s32.totalorder %v1076, 72
    %vm1177 = vmand %vm493, %vm1165
    %vm1178 = vmand %vm494, %vm1166
    %vm1179 = vmand %vm495, %vm1167
    %vm1180 = vmand %vm496, %vm1168
    %vm1181 = vmand %vm497, %vm1169
    %vm1182 = vmand %vm498, %vm1170
    %vm1183 = vmand %vm499, %vm1171
    %vm1184 = vmand %vm500, %vm1172
    %vm1185 = vmand %vm1161, %vm1173
    %vm1186 = vmand %vm1162, %vm1174
    %vm1187 = vmand %vm1163, %vm1175
    %vm1188 = vmand %vm1164, %vm1176
    %vm1189 = vmand %vm1177, %vm476
    %vm1190 = vmand %vm1178, %vm476
    %vm1191 = vmand %vm1179, %vm476
    %vm1192 = vmand %vm1180, %vm476
    %vm1193 = vmand %vm1181, %vm476
    %vm1194 = vmand %vm1182, %vm476
    %vm1195 = vmand %vm1183, %vm476
    %vm1196 = vmand %vm1184, %vm476
    %vm1197 = vmand %vm1185, %vm476
    %vm1198 = vmand %vm1186, %vm476
    %vm1199 = vmand %vm1187, %vm476
    %vm1200 = vmand %vm1188, %vm476
    %vm1201 = vmor %vm1149, %vm1189
    %vm1202 = vmor %vm1150, %vm1190
    %vm1203 = vmor %vm1151, %vm1191
    %vm1204 = vmor %vm1152, %vm1192
    %vm1205 = vmor %vm1153, %vm1193
    %vm1206 = vmor %vm1154, %vm1194
    %vm1207 = vmor %vm1155, %vm1195
    %vm1208 = vmor %vm1156, %vm1196
    %vm1209 = vmor %vm1157, %vm1197
    %vm1210 = vmor %vm1158, %vm1198
    %vm1211 = vmor %vm1159, %vm1199
    %vm1212 = vmor %vm1160, %vm1200
    %vm1213 = vcmp.ge.s32.totalorder %v107, 72
    %vm1214 = vcmp.ge.s32.totalorder %v108, 72
    %vm1215 = vcmp.ge.s32.totalorder %v259, 72
    %vm1216 = vcmp.ge.s32.totalorder %v260, 72
    %vm1217 = vcmp.ge.s32.totalorder %v391, 72
    %vm1218 = vcmp.ge.s32.totalorder %v392, 72
    %vm1219 = vcmp.ge.s32.totalorder %v393, 72
    %vm1220 = vcmp.ge.s32.totalorder %v394, 72
    %vm1221 = vcmp.ge.s32.totalorder %v1073, 72
    %vm1222 = vcmp.ge.s32.totalorder %v1074, 72
    %vm1223 = vcmp.ge.s32.totalorder %v1075, 72
    %vm1224 = vcmp.ge.s32.totalorder %v1076, 72
    %vm1225 = vcmp.lt.s32.totalorder %v107, 96
    %vm1226 = vcmp.lt.s32.totalorder %v108, 96
    %vm1227 = vcmp.lt.s32.totalorder %v259, 96
    %vm1228 = vcmp.lt.s32.totalorder %v260, 96
    %vm1229 = vcmp.lt.s32.totalorder %v391, 96
    %vm1230 = vcmp.lt.s32.totalorder %v392, 96
    %vm1231 = vcmp.lt.s32.totalorder %v393, 96
    %vm1232 = vcmp.lt.s32.totalorder %v394, 96
    %vm1233 = vcmp.lt.s32.totalorder %v1073, 96
    %vm1234 = vcmp.lt.s32.totalorder %v1074, 96
    %vm1235 = vcmp.lt.s32.totalorder %v1075, 96
    %vm1236 = vcmp.lt.s32.totalorder %v1076, 96
    %vm1237 = vmand %vm1213, %vm1225
    %vm1238 = vmand %vm1214, %vm1226
    %vm1239 = vmand %vm1215, %vm1227
    %vm1240 = vmand %vm1216, %vm1228
    %vm1241 = vmand %vm1217, %vm1229
    %vm1242 = vmand %vm1218, %vm1230
    %vm1243 = vmand %vm1219, %vm1231
    %vm1244 = vmand %vm1220, %vm1232
    %vm1245 = vmand %vm1221, %vm1233
    %vm1246 = vmand %vm1222, %vm1234
    %vm1247 = vmand %vm1223, %vm1235
    %vm1248 = vmand %vm1224, %vm1236
    %vm1249 = vmand %vm1237, %vm518
    %vm1250 = vmand %vm1238, %vm518
    %vm1251 = vmand %vm1239, %vm518
    %vm1252 = vmand %vm1240, %vm518
    %vm1253 = vmand %vm1241, %vm518
    %vm1254 = vmand %vm1242, %vm518
    %vm1255 = vmand %vm1243, %vm518
    %vm1256 = vmand %vm1244, %vm518
    %vm1257 = vmand %vm1245, %vm518
    %vm1258 = vmand %vm1246, %vm518
    %vm1259 = vmand %vm1247, %vm518
    %vm1260 = vmand %vm1248, %vm518
    %vm1261 = vmor %vm1201, %vm1249
    %vm1262 = vmor %vm1202, %vm1250
    %vm1263 = vmor %vm1203, %vm1251
    %vm1264 = vmor %vm1204, %vm1252
    %vm1265 = vmor %vm1205, %vm1253
    %vm1266 = vmor %vm1206, %vm1254
    %vm1267 = vmor %vm1207, %vm1255
    %vm1268 = vmor %vm1208, %vm1256
    %vm1269 = vmor %vm1209, %vm1257
    %vm1270 = vmor %vm1210, %vm1258
    %vm1271 = vmor %vm1211, %vm1259
    %vm1272 = vmor %vm1212, %vm1260
    %v1273 = vsel %vm1261, 1.0, 0.0
    %v1274 = vsel %vm1262, 1.0, 0.0
    %v1275 = vsel %vm1263, 1.0, 0.0
    %v1276 = vsel %vm1264, 1.0, 0.0
    %v1277 = vsel %vm1265, 1.0, 0.0
    %v1278 = vsel %vm1266, 1.0, 0.0
    %v1279 = vsel %vm1267, 1.0, 0.0
    %v1280 = vsel %vm1268, 1.0, 0.0
    %v1281 = vsel %vm1269, 1.0, 0.0
    %v1282 = vsel %vm1270, 1.0, 0.0
    %v1283 = vsel %vm1271, 1.0, 0.0
    %v1284 = vsel %vm1272, 1.0, 0.0
    %1297 = vrot.lane.b32.xlu0 %v1273, 32
    %v1298 = vpop.permute.xlu0 %1297
    %1299 = vrot.lane.b32.xlu0 %v1274, 32
    %v1300 = vpop.permute.xlu0 %1299
    %1301 = vrot.lane.b32.xlu0 %v1275, 32
    %v1302 = vpop.permute.xlu0 %1301
    %1303 = vrot.lane.b32.xlu0 %v1276, 32
    %v1304 = vpop.permute.xlu0 %1303
    %1305 = vrot.lane.b32.xlu0 %v1277, 32
    %v1306 = vpop.permute.xlu0 %1305
    %1307 = vrot.lane.b32.xlu0 %v1278, 32
    %v1308 = vpop.permute.xlu0 %1307
    %1309 = vrot.lane.b32.xlu0 %v1279, 32
    %v1310 = vpop.permute.xlu0 %1309
    %1311 = vrot.lane.b32.xlu0 %v1280, 32
    %v1312 = vpop.permute.xlu0 %1311
    %1313 = vrot.lane.b32.xlu0 %v1281, 32
    %v1314 = vpop.permute.xlu0 %1313
    %1315 = vrot.lane.b32.xlu0 %v1282, 32
    %v1316 = vpop.permute.xlu0 %1315
    %1317 = vrot.lane.b32.xlu0 %v1283, 32
    %v1318 = vpop.permute.xlu0 %1317
    %1319 = vrot.lane.b32.xlu0 %v1284, 32
    %v1320 = vpop.permute.xlu0 %1319
    %v1333 = vmul.f32 %v838, %v1298
    %v1334 = vmul.f32 %v841, %v1300
    %v1335 = vmul.f32 %v844, %v1302
    %v1336 = vmul.f32 %v838, %v1304
    %v1337 = vmul.f32 %v841, %v1306
    %v1338 = vmul.f32 %v844, %v1308
    %v1339 = vmul.f32 %v838, %v1310
    %v1340 = vmul.f32 %v841, %v1312
    %v1341 = vmul.f32 %v844, %v1314
    %v1342 = vmul.f32 %v838, %v1316
    %v1343 = vmul.f32 %v841, %v1318
    %v1344 = vmul.f32 %v844, %v1320
    %1357 = vrot.lane.b32.xlu0 %v1333, 96
    %v1358 = vpop.permute.xlu0 %1357
    %1359 = vrot.lane.b32.xlu0 %v1334, 96
    %v1360 = vpop.permute.xlu0 %1359
    %1361 = vrot.lane.b32.xlu0 %v1335, 96
    %v1362 = vpop.permute.xlu0 %1361
    %1363 = vrot.lane.b32.xlu0 %v1336, 96
    %v1364 = vpop.permute.xlu0 %1363
    %1365 = vrot.lane.b32.xlu0 %v1337, 96
    %v1366 = vpop.permute.xlu0 %1365
    %1367 = vrot.lane.b32.xlu0 %v1338, 96
    %v1368 = vpop.permute.xlu0 %1367
    %1369 = vrot.lane.b32.xlu0 %v1339, 96
    %v1370 = vpop.permute.xlu0 %1369
    %1371 = vrot.lane.b32.xlu0 %v1340, 96
    %v1372 = vpop.permute.xlu0 %1371
    %1373 = vrot.lane.b32.xlu0 %v1341, 96
    %v1374 = vpop.permute.xlu0 %1373
    %1375 = vrot.lane.b32.xlu0 %v1342, 96
    %v1376 = vpop.permute.xlu0 %1375
    %1377 = vrot.lane.b32.xlu0 %v1343, 96
    %v1378 = vpop.permute.xlu0 %1377
    %1379 = vrot.lane.b32.xlu0 %v1344, 96
    %v1380 = vpop.permute.xlu0 %1379
    %v1393 = vsel %vm76, %v1358, %v1298
    %v1394 = vsel %vm76, %v1360, %v1300
    %v1395 = vsel %vm76, %v1362, %v1302
    %v1396 = vsel %vm76, %v1364, %v1304
    %v1397 = vsel %vm76, %v1366, %v1306
    %v1398 = vsel %vm76, %v1368, %v1308
    %v1399 = vsel %vm76, %v1370, %v1310
    %v1400 = vsel %vm76, %v1372, %v1312
    %v1401 = vsel %vm76, %v1374, %v1314
    %v1402 = vsel %vm76, %v1376, %v1316
    %v1403 = vsel %vm76, %v1378, %v1318
    %v1404 = vsel %vm76, %v1380, %v1320
    %v1406 = vsel %vm1060, %v1070, 0
    %v1409 = vsel %vm1060, %v1072, 0
    %1411 = vmatpush.msra.mxu0 0.0
    %1412 = vmatpush.msra.mxu0 0.0
    %1413 = vmatpush.msra.mxu0 0.0
    %1414 = vmatpush.msra.mxu0 0.0
    %1415 = vmatpush.msra.mxu0 %v1404
    %1416 = vmatpush.msra.mxu0 %v1403
    %1417 = vmatpush.msra.mxu0 %v1402
    %1418 = vmatpush.msra.mxu0 %v1401
    %1419 = vmatpush.msra.mxu0 %v1400
    %1420 = vmatpush.msra.mxu0 %v1399
    %1421 = vmatpush.msra.mxu0 %v1398
    %1422 = vmatpush.msra.mxu0 %v1397
    %1423 = vmatpush.msra.mxu0 %v1396
    %1424 = vmatpush.msra.mxu0 %v1395
    %1425 = vmatpush.msra.mxu0 %v1394
    %1426 = vmatpush.msra.mxu0 %v1393
    %1427 = vmatmul.f32.gmra.mxu0 %v1406
    %v1428 = vpop.f32.mrf.mxu0
    %v1429 = vadd.f32 0.0, %v1428
    %1430 = vmatmul.f32.gmra.mxu0 %v1409
    %v1431 = vpop.f32.mrf.mxu0
    %v1432 = vadd.f32 0.0, %v1431
    %1433 = vdwg.mxu0
    %v1434 = vrcp.pop %v1429
    %v1435 = vrcp.pop %v1432
    %v1436 = vmul.f32 %v1429, %v1434
    %v1437 = vmul.f32 %v1432, %v1435
    %v1438 = vsub.f32 2.0, %v1436
    %v1439 = vsub.f32 2.0, %v1437
    %v1440 = vmul.f32 %v1434, %v1438
    %v1441 = vmul.f32 %v1435, %v1439
    %1444 = vrot.lane.b32.xlu0 %v1440, 96
    %v1445 = vpop.permute.xlu0 %1444
    %1446 = vrot.lane.b32.xlu0 %v1441, 96
    %v1447 = vpop.permute.xlu0 %1446
    %v1450 = vmul.f32 %v1429, %v1445
    %v1451 = vmul.f32 %v1432, %v1447
    %v1453 = vsel %vm76, %v1450, 0
    %v1456 = vsel %vm76, %v1451, 0
    %1458 = vmatpush.msra.mxu0 0.0
    %1459 = vmatpush.msra.mxu0 0.0
    %1460 = vmatpush.msra.mxu0 0.0
    %1461 = vmatpush.msra.mxu0 0.0
    %1462 = vmatpush.msra.mxu0 0.0
    %1463 = vmatpush.msra.mxu0 0.0
    %1464 = vmatpush.msra.mxu0 0.0
    %1465 = vmatpush.msra.mxu0 0.0
    %1466 = vmatpush.msra.mxu0 0.0
    %1467 = vmatpush.msra.mxu0 0.0
    %1468 = vmatpush.msra.mxu0 0.0
    %1469 = vmatpush.msra.mxu0 0.0
    %1470 = vmatpush.msra.mxu0 %v73
    %1471 = vmatpush.msra.mxu0 %v67
    %1472 = vmatpush.msra.mxu0 %v61
    %1473 = vmatpush.msra.mxu0 %v55
    %1474 = vmatmul.f32.gmra.mxu0 %v1453
    %v1475 = vpop.f32.mrf.mxu0
    %v1476 = vadd.f32 0.0, %v1475
    %1477 = vmatmul.f32.gmra.mxu0 %v1456
    %v1478 = vpop.f32.mrf.mxu0
    %v1479 = vadd.f32 0.0, %v1478
    %1480 = vdwg.mxu0
    %v1481 = vadd.f32 %v780, %v1476
    %v1482 = vadd.f32 %v781, %v1479
    %v1483 = vsel %vm76, %v1481, 0.0
    %1484 = vadd.xlane.f32.xlu0 %v1483
    %v1485 = vpop.xlane.xlu0 %1484
    %v1486 = vsel %vm76, %v1482, 0.0
    %1487 = vadd.xlane.f32.xlu0 %v1486
    %v1488 = vpop.xlane.xlu0 %1487
    %v1489 = vmul.f32 %v1485, %v737
    %v1490 = vmul.f32 %v1488, %v737
    %v1491 = vsub.f32 %v1481, %v1489
    %v1492 = vsub.f32 %v1482, %v1490
    %v1493 = vmul.f32 %v1491, %v1491
    %v1494 = vmul.f32 %v1492, %v1492
    %v1495 = vsel %vm76, %v1493, 0.0
    %1496 = vadd.xlane.f32.xlu0 %v1495
    %v1497 = vpop.xlane.xlu0 %1496
    %v1498 = vsel %vm76, %v1494, 0.0
    %1499 = vadd.xlane.f32.xlu0 %v1498
    %v1500 = vpop.xlane.xlu0 %1499
    %v1501 = vmul.f32 %v1497, %v737
    %v1502 = vmul.f32 %v1500, %v737
    %v1503 = vadd.f32 %v1501, 1e-05
    %v1504 = vadd.f32 %v1502, 1e-05
    %v1505 = vrsqrt.pop %v1503
    %v1506 = vmul.f32 %v1505, %v1503
    %v1507 = vmul.f32 %v1506, %v1505
    %v1508 = vmul.f32 0.5, %v1507
    %v1509 = vsub.f32 1.5, %v1508
    %v1510 = vmul.f32 %v1505, %v1509
    %vm1511 = vweird.f32 %v1503
    %vm1512 = vweird.f32 %v1505
    %vm1513 = vmor %vm1511, %vm1512
    %v1514 = vsel %vm1513, %v1505, %v1510
    %v1515 = vrsqrt.pop %v1504
    %v1516 = vmul.f32 %v1515, %v1504
    %v1517 = vmul.f32 %v1516, %v1515
    %v1518 = vmul.f32 0.5, %v1517
    %v1519 = vsub.f32 1.5, %v1518
    %v1520 = vmul.f32 %v1515, %v1519
    %vm1521 = vweird.f32 %v1504
    %vm1522 = vweird.f32 %v1515
    %vm1523 = vmor %vm1521, %vm1522
    %v1524 = vsel %vm1523, %v1515, %v1520
    %v1525 = vmul.f32 %v1491, %v1514
    %v1526 = vmul.f32 %v1492, %v1524
    %v1527 = vperm.slane %v75, 2
    %v1528 = vmul.f32 %v1525, %v1527
    %v1529 = vmul.f32 %v1526, %v1527
    %v1530 = vperm.slane %v75, 3
    %v1531 = vadd.f32 %v1528, %v1530
    %v1532 = vadd.f32 %v1529, %v1530
    %v1533 = vperm.slane %v75, 7
    %v1535 = vsel %vm76, %v1531, 0
    %v1538 = vsel %vm76, %v1532, 0
    %1540 = vmatpush.msra.mxu0 0.0
    %1541 = vmatpush.msra.mxu0 0.0
    %1542 = vmatpush.msra.mxu0 0.0
    %1543 = vmatpush.msra.mxu0 0.0
    %1544 = vmatpush.msra.mxu0 0.0
    %1545 = vmatpush.msra.mxu0 0.0
    %1546 = vmatpush.msra.mxu0 0.0
    %1547 = vmatpush.msra.mxu0 0.0
    %1548 = vmatpush.msra.mxu0 0.0
    %1549 = vmatpush.msra.mxu0 0.0
    %1550 = vmatpush.msra.mxu0 0.0
    %1551 = vmatpush.msra.mxu0 0.0
    %1552 = vmatpush.msra.mxu0 %v74
    %1553 = vmatpush.msra.mxu0 %v68
    %1554 = vmatpush.msra.mxu0 %v62
    %1555 = vmatpush.msra.mxu0 %v56
    %1556 = vmatmul.f32.gmra.mxu0 %v1535
    %v1557 = vpop.f32.mrf.mxu0
    %v1558 = vadd.f32 %v1533, %v1557
    %1559 = vmatmul.f32.gmra.mxu0 %v1538
    %v1560 = vpop.f32.mrf.mxu0
    %v1561 = vadd.f32 %v1533, %v1560
    %1562 = vdwg.mxu0
    %v1563 = vmax.f32 %v1558, 0.0
    %v1564 = vmax.f32 %v1561, 0.0
    %v1565 = vld [vmem:[%s4] sm:$0xff]
    %v1566 = vld [vmem:[%s4 + $0x8] sm:$0xff]
    %v1567 = vld [vmem:[%s4 + $0x10] sm:$0xff]
    %v1568 = vld [vmem:[%s4 + $0x18] sm:$0xff]
    %v1569 = vld [vmem:[%s4 + $0x20] sm:$0xff]
    %v1570 = vld [vmem:[%s4 + $0x28] sm:$0xff]
    %v1571 = vld [vmem:[%s4 + $0x30] sm:$0xff]
    %v1572 = vld [vmem:[%s4 + $0x38] sm:$0xff]
    %v1573 = vperm.slane %v75, 6
    %v1575 = vsel %vm378, %v1563, 0
    %v1578 = vsel %vm378, %v1564, 0
    %1580 = vmatpush.msra.mxu0 0.0
    %1581 = vmatpush.msra.mxu0 0.0
    %1582 = vmatpush.msra.mxu0 0.0
    %1583 = vmatpush.msra.mxu0 0.0
    %1584 = vmatpush.msra.mxu0 0.0
    %1585 = vmatpush.msra.mxu0 0.0
    %1586 = vmatpush.msra.mxu0 0.0
    %1587 = vmatpush.msra.mxu0 0.0
    %1588 = vmatpush.msra.mxu0 %v1572
    %1589 = vmatpush.msra.mxu0 %v1571
    %1590 = vmatpush.msra.mxu0 %v1570
    %1591 = vmatpush.msra.mxu0 %v1569
    %1592 = vmatpush.msra.mxu0 %v1568
    %1593 = vmatpush.msra.mxu0 %v1567
    %1594 = vmatpush.msra.mxu0 %v1566
    %1595 = vmatpush.msra.mxu0 %v1565
    %1596 = vmatmul.f32.gmra.mxu0 %v1575
    %v1597 = vpop.f32.mrf.mxu0
    %v1598 = vadd.f32 %v1573, %v1597
    %1599 = vmatmul.f32.gmra.mxu0 %v1578
    %v1600 = vpop.f32.mrf.mxu0
    %v1601 = vadd.f32 %v1573, %v1600
    %1602 = vdwg.mxu0
    %v1603 = vadd.f32 %v1531, %v1598
    %v1604 = vadd.f32 %v1532, %v1601
    %v1605 = vsel %vm76, %v1603, 0.0
    %1606 = vadd.xlane.f32.xlu0 %v1605
    %v1607 = vpop.xlane.xlu0 %1606
    %v1608 = vsel %vm76, %v1604, 0.0
    %1609 = vadd.xlane.f32.xlu0 %v1608
    %v1610 = vpop.xlane.xlu0 %1609
    %v1611 = vmul.f32 %v1607, %v737
    %v1612 = vmul.f32 %v1610, %v737
    %v1613 = vsub.f32 %v1603, %v1611
    %v1614 = vsub.f32 %v1604, %v1612
    %v1615 = vmul.f32 %v1613, %v1613
    %v1616 = vmul.f32 %v1614, %v1614
    %v1617 = vsel %vm76, %v1615, 0.0
    %1618 = vadd.xlane.f32.xlu0 %v1617
    %v1619 = vpop.xlane.xlu0 %1618
    %v1620 = vsel %vm76, %v1616, 0.0
    %1621 = vadd.xlane.f32.xlu0 %v1620
    %v1622 = vpop.xlane.xlu0 %1621
    %v1623 = vmul.f32 %v1619, %v737
    %v1624 = vmul.f32 %v1622, %v737
    %v1625 = vadd.f32 %v1623, 1e-05
    %v1626 = vadd.f32 %v1624, 1e-05
    %v1627 = vrsqrt.pop %v1625
    %v1628 = vmul.f32 %v1627, %v1625
    %v1629 = vmul.f32 %v1628, %v1627
    %v1630 = vmul.f32 0.5, %v1629
    %v1631 = vsub.f32 1.5, %v1630
    %v1632 = vmul.f32 %v1627, %v1631
    %vm1633 = vweird.f32 %v1625
    %vm1634 = vweird.f32 %v1627
    %vm1635 = vmor %vm1633, %vm1634
    %v1636 = vsel %vm1635, %v1627, %v1632
    %v1637 = vrsqrt.pop %v1626
    %v1638 = vmul.f32 %v1637, %v1626
    %v1639 = vmul.f32 %v1638, %v1637
    %v1640 = vmul.f32 0.5, %v1639
    %v1641 = vsub.f32 1.5, %v1640
    %v1642 = vmul.f32 %v1637, %v1641
    %vm1643 = vweird.f32 %v1626
    %vm1644 = vweird.f32 %v1637
    %vm1645 = vmor %vm1643, %vm1644
    %v1646 = vsel %vm1645, %v1637, %v1642
    %v1647 = vmul.f32 %v1613, %v1636
    %v1648 = vmul.f32 %v1614, %v1646
    %v1649 = vperm.slane %v75, 4
    %v1650 = vmul.f32 %v1647, %v1649
    %v1651 = vmul.f32 %v1648, %v1649
    %v1652 = vperm.slane %v75, 5
    %v1653 = vadd.f32 %v1650, %v1652
    %v1654 = vadd.f32 %v1651, %v1652
    %1655 = vst.msk [vmem:[#allocation7] sm:$0xff] %vm76, %v1653
    %1656 = vst.msk [vmem:[#allocation7 + $0x8] sm:$0xff] %vm76, %v1654
    // Predicated region
    $region26: #{tpu_custom_call.1} parent=1 // pred_check
      _
    $region27: #{tpu_custom_call.1} parent=1 // pred_check_branch
      %1658 = sbr.rel (0) target = $region29
    $region28: #{tpu_custom_call.1} parent=1 // pred_region
      %1660 = vsyncadd [#allocation6], 0
      %s1661 = sshll.u32 [#allocation7], 4
      %s1662 = int_to_ptr.vmem [resolvable:$true] %s1661
      %s1663 = sshll.u32 %s6, 4
      %s1664 = int_to_ptr.hbm [resolvable:$true] %s1663
      %1669 = dma.vmem_to_hbm [thread:$0]  %s1662, 256, %s1664, [#allocation6], 128, 128, 8
    $region29: #{tpu_custom_call.1} parent=1 // pred_fallthru
      _
    // Predicated region
    $region30: #{tpu_custom_call.1} parent=1 // pred_check
      _
    $region31: #{tpu_custom_call.1} parent=1 // pred_check_branch
      %1671 = sbr.rel (0) target = $region33
    $region32: #{tpu_custom_call.1} parent=1 // pred_region
      %1673 = dma.done [#allocation6], 256
    $region33: #{tpu_custom_call.1} parent=1 // pred_fallthru
      _
    %1674 = vsyncpa [#allocation5], 1
    %1675 = vsyncpa [#allocation6], 1

</llo_original>
